<compile_context>
chip_gen: v5e
topology: v5e:2x2
jax: 0.10.0
libtpu: 0.0.40
codegen_flags: <defaults>
</compile_context>

<pallas_src>
import functools

import numpy as np

import jax
import jax.numpy as jnp
from jax import lax
from jax.experimental import pallas as pl
from jax.experimental.pallas import tpu as pltpu


# ---------------------------------------------------------------------------
# Trace-time weight preparation (one-time per parameter set; in a real model
# these tables live next to the parameters and are built once).
# ---------------------------------------------------------------------------

def _toeplitz1(w1s, *, W, W1, K, pad, C_in, C):
    """Row-Toeplitz expansion of the (BN-scaled) conv1 weights.

    t1[ky, ci, w_in, w1*C + co] = w1s[ky, kx, ci, co] with kx = w_in - w1 + pad
    when 0 <= kx < K, else 0.  This also bakes in the conv's W zero padding and
    absorbs the NCHW channel reorder (one weight slice per input channel)."""
    L = W1 * C
    lane = np.arange(L)
    w1pos, co = lane // C, lane % C
    w_in = np.arange(W)
    kx = w_in[:, None] - w1pos[None, :] + pad                    # (W, L)
    valid = (kx >= 0) & (kx < K)
    kx_s = np.clip(kx, 0, K - 1)
    ky_i = np.arange(K)[:, None, None, None]
    ci_i = np.arange(C_in)[None, :, None, None]
    gathered = w1s[ky_i, kx_s[None, None], ci_i, co[None, None, None, :]]
    return jnp.where(valid[None, None], gathered, 0.0)           # (K, C_in, W, L)


def _toeplitz2(w2s, *, W1, W2, Wp1, K, C):
    """Row-Toeplitz expansion of the (BN-scaled) conv2 weights.  It reads the
    pool-1 "sparse" lane layout (valid data only at even-w lane groups) and
    writes dense (w2, c) output lanes, zero-padded up to the same lane width."""
    L = W1 * C
    lane_in = np.arange(L)
    w1pos, ci = lane_in // C, lane_in % C
    wp1 = w1pos // 2
    valid_in = (w1pos % 2 == 0) & (wp1 < Wp1)
    lane_out = np.arange(L)
    w2pos, co = lane_out // C, lane_out % C
    kx = wp1[:, None] - w2pos[None, :]                           # (L, L)
    valid = valid_in[:, None] & (w2pos[None, :] < W2) & (kx >= 0) & (kx < K)
    kx_s = np.clip(kx, 0, K - 1)
    ky_i = np.arange(K)[:, None, None]
    gathered = w2s[ky_i, kx_s[None], ci[None, :, None], co[None, None, :]]
    return jnp.where(valid[None], gathered, 0.0)                 # (K, L, L)


def _fc_weights(wfc, *, Hp2, Wp2, W1, C):
    """Per-pooled-row fc weight slices.  wfc rows are in torch's NCHW flatten
    order (c, hp2, wp2); each slice reads the pool-2 "sparse" lane layout."""
    L = W1 * C
    lane = np.arange(L)
    w2pos, c = lane // C, lane % C
    wp2 = w2pos // 2
    valid = (w2pos % 2 == 0) & (wp2 < Wp2)
    rows = (c[None, :] * (Hp2 * Wp2) + np.arange(Hp2)[:, None] * Wp2
            + np.where(valid, wp2, 0)[None, :])                  # (Hp2, L)
    gathered = wfc[rows]                                         # (Hp2, L, out_dim)
    return jnp.where(valid[None, :, None], gathered, 0.0)


# ---------------------------------------------------------------------------
# Kernel
# ---------------------------------------------------------------------------

def _roll(x, shift, axis):
    """jnp.roll semantics via the TPU-native rotate (shift normalized >= 0)."""
    length = x.shape[axis]
    shift = shift % length
    return x if shift == 0 else pltpu.roll(x, shift, axis)


def _conv_encoder_kernel(x_ref, t1_ref, s1_ref, t2_ref, s2_ref, wfc_ref, bfc_ref,
                         o_ref, *, N, C_in, C, H1, W, K, pad, L, Hp2):
    f32 = jnp.float32
    R = N * H1                                    # row space used end-to-end: (n, h)

    # Per-row "h within sample" index, hoisted out of the tap loops.
    hrow = lax.broadcasted_iota(jnp.int32, (R, W), 0) % H1

    # ---- layer 1: Conv2d(padding=pad) as K*C_in accumulated row-Toeplitz matmuls.
    # Output rows (n, h1) and lanes (w1, c) are fully dense: (R, L) = (32, 128).
    acc1 = jnp.zeros((R, L), f32)
    for ci in range(C_in):
        xc = x_ref[:, ci, :, :].reshape(R, W)     # rows (n, h), lanes w
        for ky in range(K):
            shift = pad - ky                      # tap reads x[(n, h1 + ky - pad)]
            if shift == 0:
                xs = xc
            else:
                xs = _roll(xc, shift, axis=0)
                valid = hrow >= shift if shift > 0 else hrow < H1 + shift
                xs = jnp.where(valid, xs, 0.0)    # rows outside the sample == zero pad
            acc1 = acc1 + jnp.dot(xs, t1_ref[ky, ci], preferred_element_type=f32)

    # ---- pool1: 2x2 max with no relayout.  Pooled values stay at even rows /
    # even-w lane groups ("sparse layout"); odd positions hold ignored garbage.
    p1 = jnp.maximum(acc1, _roll(acc1, -C, axis=1))               # W pairs (w, w+1)
    p1 = jnp.maximum(p1, _roll(p1, -1, axis=0))                   # H pairs (h, h+1)
    # Folded conv-bias + BN shift, then ReLU (exact after the max: per-channel
    # constant shift + monotone ReLU; the BN scale is already inside the weights).
    y1 = jnp.maximum(p1 + s1_ref[...], 0.0)

    # ---- layer 2: Conv2d(valid) directly on the sparse layout: the Toeplitz
    # tables read only the even-w lanes; the h taps step by 2 rows.
    acc2 = jnp.zeros((R, L), f32)
    for ky in range(K):
        yk = y1 if ky == 0 else _roll(y1, -2 * ky, axis=0)
        acc2 = acc2 + jnp.dot(yk, t2_ref[ky], preferred_element_type=f32)

    # ---- pool2 + shift + ReLU (valid rows land at multiples of 4).
    p2 = jnp.maximum(acc2, _roll(acc2, -C, axis=1))
    p2 = jnp.maximum(p2, _roll(p2, -2, axis=0))
    y2 = jnp.maximum(p2 + s2_ref[...], 0.0)                       # (R, L)

    # ---- fc: one small matmul per valid pooled row; torch's NCHW flatten order
    # and the sparse lane layout are already folded into wfc_ref.
    y2 = y2.reshape(N, H1, L)
    out = jnp.zeros((N, o_ref.shape[1]), f32)
    for hp2 in range(Hp2):
        out = out + jnp.dot(y2[:, 4 * hp2, :], wfc_ref[hp2],
                            preferred_element_type=f32)
    o_ref[...] = (out + bfc_ref[...]).astype(o_ref.dtype)


# ---------------------------------------------------------------------------
# Wrapper
# ---------------------------------------------------------------------------

def conv_encoder_forward(x_nchw, p, padding, eps):
    """ConvEncoder.forward as one fused Pallas TPU kernel (inference-mode BN)."""
    N, C_in, H, W = x_nchw.shape
    K = p['w1'].shape[0]
    C = p['w1'].shape[-1]
    out_dim = p['wfc'].shape[1]

    if 2 * padding != K - 1:
        raise NotImplementedError(
            "kernel assumes a 'same'-height conv1 (2*padding == kernel_size-1)")

    H1, W1 = H + 2 * padding - K + 1, W + 2 * padding - K + 1     # == H, W
    Hp1, Wp1 = H1 // 2, W1 // 2
    H2, W2 = Hp1 - K + 1, Wp1 - K + 1
    Hp2, Wp2 = H2 // 2, W2 // 2
    L = W1 * C                                   # lane width used end-to-end (=128 here)

    # --- trace-time parameter folding (BN scale into weights, shifts, Toeplitz) ---
    # TODO(synk): BatchNorm uses running statistics (inference mode); training-mode
    # batch statistics are not computed inside the kernel.
    scale1 = p['g1'] / jnp.sqrt(p['v1'] + eps)
    shift1 = p['be1'] + (p['b1'] - p['m1']) * scale1
    scale2 = p['g2'] / jnp.sqrt(p['v2'] + eps)
    shift2 = p['be2'] + (p['b2'] - p['m2']) * scale2

    t1 = _toeplitz1(p['w1'] * scale1, W=W, W1=W1, K=K, pad=padding, C_in=C_in, C=C)
    t2 = _toeplitz2(p['w2'] * scale2, W1=W1, W2=W2, Wp1=Wp1, K=K, C=C)
    wfc = _fc_weights(p['wfc'], Hp2=Hp2, Wp2=Wp2, W1=W1, C=C)
    s1 = jnp.tile(shift1, W1).reshape(1, L)
    s2 = jnp.tile(shift2, W1).reshape(1, L)
    bfc = p['bfc'].reshape(1, out_dim)

    kernel = functools.partial(_conv_encoder_kernel, N=N, C_in=C_in, C=C, H1=H1,
                               W=W, K=K, pad=padding, L=L, Hp2=Hp2)

    R = N * H1
    flops = 2 * (K * C_in * R * W * L + K * R * L * L + Hp2 * N * L * out_dim)
    bytes_accessed = int(sum(int(a.size) for a in (x_nchw, t1, s1, t2, s2, wfc, bfc)) * 4
                         + N * out_dim * 4)

    # Single fused call: the whole model (<1 MiB working set) lives in VMEM.
    # grid=(1,): at N=2 a parallel batch axis would only add per-step overhead
    # (revisit for large N on v7x's 2 TensorCores).
    return pl.pallas_call(
        kernel,
        out_shape=jax.ShapeDtypeStruct((N, out_dim), jnp.float32),
        grid=(1,),
        in_specs=[
            pl.BlockSpec((N, C_in, H, W), lambda i: (0, 0, 0, 0)),
            pl.BlockSpec((K, C_in, W, L), lambda i: (0, 0, 0, 0)),
            pl.BlockSpec((1, L), lambda i: (0, 0)),
            pl.BlockSpec((K, L, L), lambda i: (0, 0, 0)),
            pl.BlockSpec((1, L), lambda i: (0, 0)),
            pl.BlockSpec((Hp2, L, out_dim), lambda i: (0, 0, 0)),
            pl.BlockSpec((1, out_dim), lambda i: (0, 0)),
        ],
        out_specs=pl.BlockSpec((N, out_dim), lambda i: (0, 0)),
        compiler_params=pltpu.CompilerParams(dimension_semantics=("arbitrary",)),
        cost_estimate=pl.CostEstimate(flops=int(flops), transcendentals=0,
                                      bytes_accessed=bytes_accessed),
    )(x_nchw, t1, s1, t2, s2, wfc, bfc)


# ---------------------------------------------------------------------------
# Pure-JAX (XLA) reference for validation.
# ---------------------------------------------------------------------------

def reference_forward(x_nchw, p, padding, eps):
    x = jnp.transpose(x_nchw, (0, 2, 3, 1))

    def layer(h, w, b, g, be, m, v, pad):
        y = jax.lax.conv_general_dilated(
            h, w, window_strides=(1, 1), padding=[(pad, pad), (pad, pad)],
            dimension_numbers=('NHWC', 'HWIO', 'NHWC')) + b
        y = g * (y - m) / jnp.sqrt(v + eps) + be
        y = jnp.maximum(y, 0.0)
        return jax.lax.reduce_window(y, -jnp.inf, jax.lax.max,
                                     (1, 2, 2, 1), (1, 2, 2, 1), 'VALID')

    h = layer(x, p['w1'], p['b1'], p['g1'], p['be1'], p['m1'], p['v1'], padding)
    h = layer(h, p['w2'], p['b2'], p['g2'], p['be2'], p['m2'], p['v2'], 0)
    h = jnp.transpose(h, (0, 3, 1, 2)).reshape(h.shape[0], -1)
    return h @ p['wfc'] + p['bfc']


if __name__ == "__main__":
    # ConvEncoder(out_dim=32, input_shape=(4, 16, 16), n_filter=8, kernel_size=3, padding=1)
    out_dim, C_in, H = 32, 4, 16
    n_filter, K, pad = 8, 3, 1
    eps = 1e-5

    key = jax.random.PRNGKey(0)
    ks = jax.random.split(key, 16)
    p = {
        'w1': 0.1 * jax.random.normal(ks[0], (K, K, C_in, n_filter), jnp.float32),
        'b1': 0.1 * jax.random.normal(ks[1], (n_filter,), jnp.float32),
        'g1': 1.0 + 0.1 * jax.random.normal(ks[2], (n_filter,), jnp.float32),
        'be1': 0.1 * jax.random.normal(ks[3], (n_filter,), jnp.float32),
        'm1': 0.1 * jax.random.normal(ks[4], (n_filter,), jnp.float32),
        'v1': jax.random.uniform(ks[5], (n_filter,), jnp.float32, 0.5, 1.5),
        'w2': 0.1 * jax.random.normal(ks[6], (K, K, n_filter, n_filter), jnp.float32),
        'b2': 0.1 * jax.random.normal(ks[7], (n_filter,), jnp.float32),
        'g2': 1.0 + 0.1 * jax.random.normal(ks[8], (n_filter,), jnp.float32),
        'be2': 0.1 * jax.random.normal(ks[9], (n_filter,), jnp.float32),
        'm2': 0.1 * jax.random.normal(ks[10], (n_filter,), jnp.float32),
        'v2': jax.random.uniform(ks[11], (n_filter,), jnp.float32, 0.5, 1.5),
    }
    l1 = (H - K + 2 * pad + 1) // 2          # 8
    l2 = (l1 - K + 1) // 2                   # 3
    fc_in = l2 * l2 * n_filter               # 72
    p['wfc'] = 0.1 * jax.random.normal(ks[12], (fc_in, out_dim), jnp.float32)
    p['bfc'] = 0.1 * jax.random.normal(ks[13], (out_dim,), jnp.float32)

    x = jax.random.normal(ks[14], (2, C_in, H, H), jnp.float32)   # NCHW, like PyTorch

    out = jax.block_until_ready(conv_encoder_forward(x, p, pad, eps))
    ref = jax.block_until_ready(reference_forward(x, p, pad, eps))

    assert out.shape == (2, out_dim), out.shape
    assert jnp.allclose(out, ref, atol=2e-3, rtol=2e-3), float(jnp.max(jnp.abs(out - ref)))
    print("KERNEL_OK")
</pallas_src>

<mosaic_0001>
module attributes {stable_mosaic.version = 11 : i64} {
  func.func @_conv_encoder_kernel(%arg0: i32, %arg1: memref<2x4x16x16xf32, #tpu.memory_space<vmem>>, %arg2: memref<3x4x16x128xf32, #tpu.memory_space<vmem>>, %arg3: memref<1x128xf32, #tpu.memory_space<vmem>>, %arg4: memref<3x128x128xf32, #tpu.memory_space<vmem>>, %arg5: memref<1x128xf32, #tpu.memory_space<vmem>>, %arg6: memref<3x128x32xf32, #tpu.memory_space<vmem>>, %arg7: memref<1x32xf32, #tpu.memory_space<vmem>>, %arg8: memref<2x32xf32, #tpu.memory_space<vmem>>) attributes {dimension_semantics = [#tpu.dimension_semantics<arbitrary>], iteration_bounds = array<i64: 1>, scalar_prefetch = 0 : i64, scratch_operands = 0 : i64, tpu.core_type = #tpu.core_type<tc>, window_params = [{pipeline_mode = #tpu.pipeline_mode<synchronous>, transform_indices = @transform_0, window_bounds = array<i64: 2, 4, 16, 16>}, {pipeline_mode = #tpu.pipeline_mode<synchronous>, transform_indices = @transform_1, window_bounds = array<i64: 3, 4, 16, 128>}, {pipeline_mode = #tpu.pipeline_mode<synchronous>, transform_indices = @transform_2, window_bounds = array<i64: 1, 128>}, {pipeline_mode = #tpu.pipeline_mode<synchronous>, transform_indices = @transform_3, window_bounds = array<i64: 3, 128, 128>}, {pipeline_mode = #tpu.pipeline_mode<synchronous>, transform_indices = @transform_4, window_bounds = array<i64: 1, 128>}, {pipeline_mode = #tpu.pipeline_mode<synchronous>, transform_indices = @transform_5, window_bounds = array<i64: 3, 128, 32>}, {pipeline_mode = #tpu.pipeline_mode<synchronous>, transform_indices = @transform_6, window_bounds = array<i64: 1, 32>}, {pipeline_mode = #tpu.pipeline_mode<synchronous>, transform_indices = @transform_7, window_bounds = array<i64: 2, 32>}]} {
    %0 = tpu.iota {dimensions = array<i32: 0>} : vector<32x16xi32>
    %c16_i32 = arith.constant 16 : i32
    %c0_i32 = arith.constant 0 : i32
    %1 = arith.cmpi eq, %c16_i32, %c0_i32 : i32
    %c1_i32 = arith.constant 1 : i32
    %2 = arith.select %1, %c1_i32, %c16_i32 : i32
    %3 = vector.broadcast %2 : i32 to vector<32x16xi32>
    %4 = arith.remsi %0, %3 : vector<32x16xi32>
    %c0_i32_0 = arith.constant 0 : i32
    %5 = vector.broadcast %c0_i32_0 : i32 to vector<32x16xi32>
    %6 = arith.cmpi ne, %4, %5 : vector<32x16xi32>
    %c0_i32_1 = arith.constant 0 : i32
    %7 = vector.broadcast %c0_i32_1 : i32 to vector<32x16xi32>
    %8 = arith.cmpi slt, %4, %7 : vector<32x16xi32>
    %c0_i32_2 = arith.constant 0 : i32
    %9 = arith.cmpi slt, %2, %c0_i32_2 : i32
    %10 = vector.broadcast %9 : i1 to vector<32x16xi1>
    %11 = vector.broadcast %10 : vector<32x16xi1> to vector<32x16xi1>
    %12 = arith.xori %8, %11 : vector<32x16xi1>
    %13 = arith.andi %12, %6 : vector<32x16xi1>
    %14 = vector.broadcast %2 : i32 to vector<32x16xi32>
    %15 = arith.addi %4, %14 : vector<32x16xi32>
    %16 = arith.select %13, %15, %4 : vector<32x16xi1>, vector<32x16xi32>
    %cst = arith.constant 0.000000e+00 : f32
    %17 = vector.broadcast %cst : f32 to vector<32x128xf32>
    %c0 = arith.constant 0 : index
    %c0_3 = arith.constant 0 : index
    %c0_4 = arith.constant 0 : index
    %c0_5 = arith.constant 0 : index
    %18 = vector.load %arg1[%c0, %c0_3, %c0_4, %c0_5] : memref<2x4x16x16xf32, #tpu.memory_space<vmem>>, vector<2x1x16x16xf32>
    %19 = vector.shape_cast %18 : vector<2x1x16x16xf32> to vector<2x16x16xf32>
    %20 = vector.shape_cast %19 : vector<2x16x16xf32> to vector<32x16xf32>
    %c1_i32_6 = arith.constant 1 : i32
    %21 = tpu.dynamic_rotate %20 by %c1_i32_6 dim 0 : vector<32x16xf32>, i32 -> vector<32x16xf32>
    %c1_i32_7 = arith.constant 1 : i32
    %22 = vector.broadcast %c1_i32_7 : i32 to vector<32x16xi32>
    %23 = arith.cmpi sge, %16, %22 : vector<32x16xi32>
    %cst_8 = arith.constant 0.000000e+00 : f32
    %24 = vector.broadcast %cst_8 : f32 to vector<32x16xf32>
    %25 = arith.select %23, %21, %24 : vector<32x16xi1>, vector<32x16xf32>
    %c0_9 = arith.constant 0 : index
    %c0_10 = arith.constant 0 : index
    %c0_11 = arith.constant 0 : index
    %c0_12 = arith.constant 0 : index
    %26 = vector.load %arg2[%c0_9, %c0_10, %c0_11, %c0_12] : memref<3x4x16x128xf32, #tpu.memory_space<vmem>>, vector<1x1x16x128xf32>
    %27 = vector.shape_cast %26 : vector<1x1x16x128xf32> to vector<16x128xf32>
    %cst_13 = arith.constant dense<0.000000e+00> : vector<32x128xf32>
    %28 = tpu.matmul %25, %27, %cst_13 {dimension_numbers = #tpu.dot_dimension_numbers<[1], [0], [0], [1], [0, 0, 1, 1], [], []>} : vector<32x16xf32>, vector<16x128xf32>, vector<32x128xf32> -> vector<32x128xf32>
    %29 = arith.addf %17, %28 : vector<32x128xf32>
    %c1 = arith.constant 1 : index
    %c0_14 = arith.constant 0 : index
    %c0_15 = arith.constant 0 : index
    %c0_16 = arith.constant 0 : index
    %30 = vector.load %arg2[%c1, %c0_14, %c0_15, %c0_16] : memref<3x4x16x128xf32, #tpu.memory_space<vmem>>, vector<1x1x16x128xf32>
    %31 = vector.shape_cast %30 : vector<1x1x16x128xf32> to vector<16x128xf32>
    %cst_17 = arith.constant dense<0.000000e+00> : vector<32x128xf32>
    %32 = tpu.matmul %20, %31, %cst_17 {dimension_numbers = #tpu.dot_dimension_numbers<[1], [0], [0], [1], [0, 0, 1, 1], [], []>} : vector<32x16xf32>, vector<16x128xf32>, vector<32x128xf32> -> vector<32x128xf32>
    %33 = arith.addf %29, %32 : vector<32x128xf32>
    %c31_i32 = arith.constant 31 : i32
    %34 = tpu.dynamic_rotate %20 by %c31_i32 dim 0 : vector<32x16xf32>, i32 -> vector<32x16xf32>
    %c15_i32 = arith.constant 15 : i32
    %35 = vector.broadcast %c15_i32 : i32 to vector<32x16xi32>
    %36 = arith.cmpi slt, %16, %35 : vector<32x16xi32>
    %cst_18 = arith.constant 0.000000e+00 : f32
    %37 = vector.broadcast %cst_18 : f32 to vector<32x16xf32>
    %38 = arith.select %36, %34, %37 : vector<32x16xi1>, vector<32x16xf32>
    %c2 = arith.constant 2 : index
    %c0_19 = arith.constant 0 : index
    %c0_20 = arith.constant 0 : index
    %c0_21 = arith.constant 0 : index
    %39 = vector.load %arg2[%c2, %c0_19, %c0_20, %c0_21] : memref<3x4x16x128xf32, #tpu.memory_space<vmem>>, vector<1x1x16x128xf32>
    %40 = vector.shape_cast %39 : vector<1x1x16x128xf32> to vector<16x128xf32>
    %cst_22 = arith.constant dense<0.000000e+00> : vector<32x128xf32>
    %41 = tpu.matmul %38, %40, %cst_22 {dimension_numbers = #tpu.dot_dimension_numbers<[1], [0], [0], [1], [0, 0, 1, 1], [], []>} : vector<32x16xf32>, vector<16x128xf32>, vector<32x128xf32> -> vector<32x128xf32>
    %42 = arith.addf %33, %41 : vector<32x128xf32>
    %c0_23 = arith.constant 0 : index
    %c1_24 = arith.constant 1 : index
    %c0_25 = arith.constant 0 : index
    %c0_26 = arith.constant 0 : index
    %43 = vector.load %arg1[%c0_23, %c1_24, %c0_25, %c0_26] : memref<2x4x16x16xf32, #tpu.memory_space<vmem>>, vector<2x1x16x16xf32>
    %44 = vector.shape_cast %43 : vector<2x1x16x16xf32> to vector<2x16x16xf32>
    %45 = vector.shape_cast %44 : vector<2x16x16xf32> to vector<32x16xf32>
    %c1_i32_27 = arith.constant 1 : i32
    %46 = tpu.dynamic_rotate %45 by %c1_i32_27 dim 0 : vector<32x16xf32>, i32 -> vector<32x16xf32>
    %c1_i32_28 = arith.constant 1 : i32
    %47 = vector.broadcast %c1_i32_28 : i32 to vector<32x16xi32>
    %48 = arith.cmpi sge, %16, %47 : vector<32x16xi32>
    %cst_29 = arith.constant 0.000000e+00 : f32
    %49 = vector.broadcast %cst_29 : f32 to vector<32x16xf32>
    %50 = arith.select %48, %46, %49 : vector<32x16xi1>, vector<32x16xf32>
    %c0_30 = arith.constant 0 : index
    %c1_31 = arith.constant 1 : index
    %c0_32 = arith.constant 0 : index
    %c0_33 = arith.constant 0 : index
    %51 = vector.load %arg2[%c0_30, %c1_31, %c0_32, %c0_33] : memref<3x4x16x128xf32, #tpu.memory_space<vmem>>, vector<1x1x16x128xf32>
    %52 = vector.shape_cast %51 : vector<1x1x16x128xf32> to vector<16x128xf32>
    %cst_34 = arith.constant dense<0.000000e+00> : vector<32x128xf32>
    %53 = tpu.matmul %50, %52, %cst_34 {dimension_numbers = #tpu.dot_dimension_numbers<[1], [0], [0], [1], [0, 0, 1, 1], [], []>} : vector<32x16xf32>, vector<16x128xf32>, vector<32x128xf32> -> vector<32x128xf32>
    %54 = arith.addf %42, %53 : vector<32x128xf32>
    %c1_35 = arith.constant 1 : index
    %c1_36 = arith.constant 1 : index
    %c0_37 = arith.constant 0 : index
    %c0_38 = arith.constant 0 : index
    %55 = vector.load %arg2[%c1_35, %c1_36, %c0_37, %c0_38] : memref<3x4x16x128xf32, #tpu.memory_space<vmem>>, vector<1x1x16x128xf32>
    %56 = vector.shape_cast %55 : vector<1x1x16x128xf32> to vector<16x128xf32>
    %cst_39 = arith.constant dense<0.000000e+00> : vector<32x128xf32>
    %57 = tpu.matmul %45, %56, %cst_39 {dimension_numbers = #tpu.dot_dimension_numbers<[1], [0], [0], [1], [0, 0, 1, 1], [], []>} : vector<32x16xf32>, vector<16x128xf32>, vector<32x128xf32> -> vector<32x128xf32>
    %58 = arith.addf %54, %57 : vector<32x128xf32>
    %c31_i32_40 = arith.constant 31 : i32
    %59 = tpu.dynamic_rotate %45 by %c31_i32_40 dim 0 : vector<32x16xf32>, i32 -> vector<32x16xf32>
    %c15_i32_41 = arith.constant 15 : i32
    %60 = vector.broadcast %c15_i32_41 : i32 to vector<32x16xi32>
    %61 = arith.cmpi slt, %16, %60 : vector<32x16xi32>
    %cst_42 = arith.constant 0.000000e+00 : f32
    %62 = vector.broadcast %cst_42 : f32 to vector<32x16xf32>
    %63 = arith.select %61, %59, %62 : vector<32x16xi1>, vector<32x16xf32>
    %c2_43 = arith.constant 2 : index
    %c1_44 = arith.constant 1 : index
    %c0_45 = arith.constant 0 : index
    %c0_46 = arith.constant 0 : index
    %64 = vector.load %arg2[%c2_43, %c1_44, %c0_45, %c0_46] : memref<3x4x16x128xf32, #tpu.memory_space<vmem>>, vector<1x1x16x128xf32>
    %65 = vector.shape_cast %64 : vector<1x1x16x128xf32> to vector<16x128xf32>
    %cst_47 = arith.constant dense<0.000000e+00> : vector<32x128xf32>
    %66 = tpu.matmul %63, %65, %cst_47 {dimension_numbers = #tpu.dot_dimension_numbers<[1], [0], [0], [1], [0, 0, 1, 1], [], []>} : vector<32x16xf32>, vector<16x128xf32>, vector<32x128xf32> -> vector<32x128xf32>
    %67 = arith.addf %58, %66 : vector<32x128xf32>
    %c0_48 = arith.constant 0 : index
    %c2_49 = arith.constant 2 : index
    %c0_50 = arith.constant 0 : index
    %c0_51 = arith.constant 0 : index
    %68 = vector.load %arg1[%c0_48, %c2_49, %c0_50, %c0_51] : memref<2x4x16x16xf32, #tpu.memory_space<vmem>>, vector<2x1x16x16xf32>
    %69 = vector.shape_cast %68 : vector<2x1x16x16xf32> to vector<2x16x16xf32>
    %70 = vector.shape_cast %69 : vector<2x16x16xf32> to vector<32x16xf32>
    %c1_i32_52 = arith.constant 1 : i32
    %71 = tpu.dynamic_rotate %70 by %c1_i32_52 dim 0 : vector<32x16xf32>, i32 -> vector<32x16xf32>
    %c1_i32_53 = arith.constant 1 : i32
    %72 = vector.broadcast %c1_i32_53 : i32 to vector<32x16xi32>
    %73 = arith.cmpi sge, %16, %72 : vector<32x16xi32>
    %cst_54 = arith.constant 0.000000e+00 : f32
    %74 = vector.broadcast %cst_54 : f32 to vector<32x16xf32>
    %75 = arith.select %73, %71, %74 : vector<32x16xi1>, vector<32x16xf32>
    %c0_55 = arith.constant 0 : index
    %c2_56 = arith.constant 2 : index
    %c0_57 = arith.constant 0 : index
    %c0_58 = arith.constant 0 : index
    %76 = vector.load %arg2[%c0_55, %c2_56, %c0_57, %c0_58] : memref<3x4x16x128xf32, #tpu.memory_space<vmem>>, vector<1x1x16x128xf32>
    %77 = vector.shape_cast %76 : vector<1x1x16x128xf32> to vector<16x128xf32>
    %cst_59 = arith.constant dense<0.000000e+00> : vector<32x128xf32>
    %78 = tpu.matmul %75, %77, %cst_59 {dimension_numbers = #tpu.dot_dimension_numbers<[1], [0], [0], [1], [0, 0, 1, 1], [], []>} : vector<32x16xf32>, vector<16x128xf32>, vector<32x128xf32> -> vector<32x128xf32>
    %79 = arith.addf %67, %78 : vector<32x128xf32>
    %c1_60 = arith.constant 1 : index
    %c2_61 = arith.constant 2 : index
    %c0_62 = arith.constant 0 : index
    %c0_63 = arith.constant 0 : index
    %80 = vector.load %arg2[%c1_60, %c2_61, %c0_62, %c0_63] : memref<3x4x16x128xf32, #tpu.memory_space<vmem>>, vector<1x1x16x128xf32>
    %81 = vector.shape_cast %80 : vector<1x1x16x128xf32> to vector<16x128xf32>
    %cst_64 = arith.constant dense<0.000000e+00> : vector<32x128xf32>
    %82 = tpu.matmul %70, %81, %cst_64 {dimension_numbers = #tpu.dot_dimension_numbers<[1], [0], [0], [1], [0, 0, 1, 1], [], []>} : vector<32x16xf32>, vector<16x128xf32>, vector<32x128xf32> -> vector<32x128xf32>
    %83 = arith.addf %79, %82 : vector<32x128xf32>
    %c31_i32_65 = arith.constant 31 : i32
    %84 = tpu.dynamic_rotate %70 by %c31_i32_65 dim 0 : vector<32x16xf32>, i32 -> vector<32x16xf32>
    %c15_i32_66 = arith.constant 15 : i32
    %85 = vector.broadcast %c15_i32_66 : i32 to vector<32x16xi32>
    %86 = arith.cmpi slt, %16, %85 : vector<32x16xi32>
    %cst_67 = arith.constant 0.000000e+00 : f32
    %87 = vector.broadcast %cst_67 : f32 to vector<32x16xf32>
    %88 = arith.select %86, %84, %87 : vector<32x16xi1>, vector<32x16xf32>
    %c2_68 = arith.constant 2 : index
    %c2_69 = arith.constant 2 : index
    %c0_70 = arith.constant 0 : index
    %c0_71 = arith.constant 0 : index
    %89 = vector.load %arg2[%c2_68, %c2_69, %c0_70, %c0_71] : memref<3x4x16x128xf32, #tpu.memory_space<vmem>>, vector<1x1x16x128xf32>
    %90 = vector.shape_cast %89 : vector<1x1x16x128xf32> to vector<16x128xf32>
    %cst_72 = arith.constant dense<0.000000e+00> : vector<32x128xf32>
    %91 = tpu.matmul %88, %90, %cst_72 {dimension_numbers = #tpu.dot_dimension_numbers<[1], [0], [0], [1], [0, 0, 1, 1], [], []>} : vector<32x16xf32>, vector<16x128xf32>, vector<32x128xf32> -> vector<32x128xf32>
    %92 = arith.addf %83, %91 : vector<32x128xf32>
    %c0_73 = arith.constant 0 : index
    %c3 = arith.constant 3 : index
    %c0_74 = arith.constant 0 : index
    %c0_75 = arith.constant 0 : index
    %93 = vector.load %arg1[%c0_73, %c3, %c0_74, %c0_75] : memref<2x4x16x16xf32, #tpu.memory_space<vmem>>, vector<2x1x16x16xf32>
    %94 = vector.shape_cast %93 : vector<2x1x16x16xf32> to vector<2x16x16xf32>
    %95 = vector.shape_cast %94 : vector<2x16x16xf32> to vector<32x16xf32>
    %c1_i32_76 = arith.constant 1 : i32
    %96 = tpu.dynamic_rotate %95 by %c1_i32_76 dim 0 : vector<32x16xf32>, i32 -> vector<32x16xf32>
    %c1_i32_77 = arith.constant 1 : i32
    %97 = vector.broadcast %c1_i32_77 : i32 to vector<32x16xi32>
    %98 = arith.cmpi sge, %16, %97 : vector<32x16xi32>
    %cst_78 = arith.constant 0.000000e+00 : f32
    %99 = vector.broadcast %cst_78 : f32 to vector<32x16xf32>
    %100 = arith.select %98, %96, %99 : vector<32x16xi1>, vector<32x16xf32>
    %c0_79 = arith.constant 0 : index
    %c3_80 = arith.constant 3 : index
    %c0_81 = arith.constant 0 : index
    %c0_82 = arith.constant 0 : index
    %101 = vector.load %arg2[%c0_79, %c3_80, %c0_81, %c0_82] : memref<3x4x16x128xf32, #tpu.memory_space<vmem>>, vector<1x1x16x128xf32>
    %102 = vector.shape_cast %101 : vector<1x1x16x128xf32> to vector<16x128xf32>
    %cst_83 = arith.constant dense<0.000000e+00> : vector<32x128xf32>
    %103 = tpu.matmul %100, %102, %cst_83 {dimension_numbers = #tpu.dot_dimension_numbers<[1], [0], [0], [1], [0, 0, 1, 1], [], []>} : vector<32x16xf32>, vector<16x128xf32>, vector<32x128xf32> -> vector<32x128xf32>
    %104 = arith.addf %92, %103 : vector<32x128xf32>
    %c1_84 = arith.constant 1 : index
    %c3_85 = arith.constant 3 : index
    %c0_86 = arith.constant 0 : index
    %c0_87 = arith.constant 0 : index
    %105 = vector.load %arg2[%c1_84, %c3_85, %c0_86, %c0_87] : memref<3x4x16x128xf32, #tpu.memory_space<vmem>>, vector<1x1x16x128xf32>
    %106 = vector.shape_cast %105 : vector<1x1x16x128xf32> to vector<16x128xf32>
    %cst_88 = arith.constant dense<0.000000e+00> : vector<32x128xf32>
    %107 = tpu.matmul %95, %106, %cst_88 {dimension_numbers = #tpu.dot_dimension_numbers<[1], [0], [0], [1], [0, 0, 1, 1], [], []>} : vector<32x16xf32>, vector<16x128xf32>, vector<32x128xf32> -> vector<32x128xf32>
    %108 = arith.addf %104, %107 : vector<32x128xf32>
    %c31_i32_89 = arith.constant 31 : i32
    %109 = tpu.dynamic_rotate %95 by %c31_i32_89 dim 0 : vector<32x16xf32>, i32 -> vector<32x16xf32>
    %c15_i32_90 = arith.constant 15 : i32
    %110 = vector.broadcast %c15_i32_90 : i32 to vector<32x16xi32>
    %111 = arith.cmpi slt, %16, %110 : vector<32x16xi32>
    %cst_91 = arith.constant 0.000000e+00 : f32
    %112 = vector.broadcast %cst_91 : f32 to vector<32x16xf32>
    %113 = arith.select %111, %109, %112 : vector<32x16xi1>, vector<32x16xf32>
    %c2_92 = arith.constant 2 : index
    %c3_93 = arith.constant 3 : index
    %c0_94 = arith.constant 0 : index
    %c0_95 = arith.constant 0 : index
    %114 = vector.load %arg2[%c2_92, %c3_93, %c0_94, %c0_95] : memref<3x4x16x128xf32, #tpu.memory_space<vmem>>, vector<1x1x16x128xf32>
    %115 = vector.shape_cast %114 : vector<1x1x16x128xf32> to vector<16x128xf32>
    %cst_96 = arith.constant dense<0.000000e+00> : vector<32x128xf32>
    %116 = tpu.matmul %113, %115, %cst_96 {dimension_numbers = #tpu.dot_dimension_numbers<[1], [0], [0], [1], [0, 0, 1, 1], [], []>} : vector<32x16xf32>, vector<16x128xf32>, vector<32x128xf32> -> vector<32x128xf32>
    %117 = arith.addf %108, %116 : vector<32x128xf32>
    %c120_i32 = arith.constant 120 : i32
    %118 = tpu.dynamic_rotate %117 by %c120_i32 dim 1 : vector<32x128xf32>, i32 -> vector<32x128xf32>
    %119 = arith.maximumf %117, %118 : vector<32x128xf32>
    %c31_i32_97 = arith.constant 31 : i32
    %120 = tpu.dynamic_rotate %119 by %c31_i32_97 dim 0 : vector<32x128xf32>, i32 -> vector<32x128xf32>
    %121 = arith.maximumf %119, %120 : vector<32x128xf32>
    %c0_98 = arith.constant 0 : index
    %c0_99 = arith.constant 0 : index
    %122 = vector.load %arg3[%c0_98, %c0_99] : memref<1x128xf32, #tpu.memory_space<vmem>>, vector<1x128xf32>
    %123 = vector.broadcast %122 : vector<1x128xf32> to vector<32x128xf32>
    %124 = arith.addf %121, %123 : vector<32x128xf32>
    %cst_100 = arith.constant 0.000000e+00 : f32
    %125 = vector.broadcast %cst_100 : f32 to vector<32x128xf32>
    %126 = arith.maximumf %124, %125 : vector<32x128xf32>
    %cst_101 = arith.constant 0.000000e+00 : f32
    %127 = vector.broadcast %cst_101 : f32 to vector<32x128xf32>
    %c0_102 = arith.constant 0 : index
    %c0_103 = arith.constant 0 : index
    %c0_104 = arith.constant 0 : index
    %128 = vector.load %arg4[%c0_102, %c0_103, %c0_104] : memref<3x128x128xf32, #tpu.memory_space<vmem>>, vector<1x128x128xf32>
    %129 = vector.shape_cast %128 : vector<1x128x128xf32> to vector<128x128xf32>
    %cst_105 = arith.constant dense<0.000000e+00> : vector<32x128xf32>
    %130 = tpu.matmul %126, %129, %cst_105 {dimension_numbers = #tpu.dot_dimension_numbers<[1], [0], [0], [1], [0, 0, 1, 1], [], []>} : vector<32x128xf32>, vector<128x128xf32>, vector<32x128xf32> -> vector<32x128xf32>
    %131 = arith.addf %127, %130 : vector<32x128xf32>
    %c30_i32 = arith.constant 30 : i32
    %132 = tpu.dynamic_rotate %126 by %c30_i32 dim 0 : vector<32x128xf32>, i32 -> vector<32x128xf32>
    %c1_106 = arith.constant 1 : index
    %c0_107 = arith.constant 0 : index
    %c0_108 = arith.constant 0 : index
    %133 = vector.load %arg4[%c1_106, %c0_107, %c0_108] : memref<3x128x128xf32, #tpu.memory_space<vmem>>, vector<1x128x128xf32>
    %134 = vector.shape_cast %133 : vector<1x128x128xf32> to vector<128x128xf32>
    %cst_109 = arith.constant dense<0.000000e+00> : vector<32x128xf32>
    %135 = tpu.matmul %132, %134, %cst_109 {dimension_numbers = #tpu.dot_dimension_numbers<[1], [0], [0], [1], [0, 0, 1, 1], [], []>} : vector<32x128xf32>, vector<128x128xf32>, vector<32x128xf32> -> vector<32x128xf32>
    %136 = arith.addf %131, %135 : vector<32x128xf32>
    %c28_i32 = arith.constant 28 : i32
    %137 = tpu.dynamic_rotate %126 by %c28_i32 dim 0 : vector<32x128xf32>, i32 -> vector<32x128xf32>
    %c2_110 = arith.constant 2 : index
    %c0_111 = arith.constant 0 : index
    %c0_112 = arith.constant 0 : index
    %138 = vector.load %arg4[%c2_110, %c0_111, %c0_112] : memref<3x128x128xf32, #tpu.memory_space<vmem>>, vector<1x128x128xf32>
    %139 = vector.shape_cast %138 : vector<1x128x128xf32> to vector<128x128xf32>
    %cst_113 = arith.constant dense<0.000000e+00> : vector<32x128xf32>
    %140 = tpu.matmul %137, %139, %cst_113 {dimension_numbers = #tpu.dot_dimension_numbers<[1], [0], [0], [1], [0, 0, 1, 1], [], []>} : vector<32x128xf32>, vector<128x128xf32>, vector<32x128xf32> -> vector<32x128xf32>
    %141 = arith.addf %136, %140 : vector<32x128xf32>
    %c120_i32_114 = arith.constant 120 : i32
    %142 = tpu.dynamic_rotate %141 by %c120_i32_114 dim 1 : vector<32x128xf32>, i32 -> vector<32x128xf32>
    %143 = arith.maximumf %141, %142 : vector<32x128xf32>
    %c30_i32_115 = arith.constant 30 : i32
    %144 = tpu.dynamic_rotate %143 by %c30_i32_115 dim 0 : vector<32x128xf32>, i32 -> vector<32x128xf32>
    %145 = arith.maximumf %143, %144 : vector<32x128xf32>
    %c0_116 = arith.constant 0 : index
    %c0_117 = arith.constant 0 : index
    %146 = vector.load %arg5[%c0_116, %c0_117] : memref<1x128xf32, #tpu.memory_space<vmem>>, vector<1x128xf32>
    %147 = vector.broadcast %146 : vector<1x128xf32> to vector<32x128xf32>
    %148 = arith.addf %145, %147 : vector<32x128xf32>
    %cst_118 = arith.constant 0.000000e+00 : f32
    %149 = vector.broadcast %cst_118 : f32 to vector<32x128xf32>
    %150 = arith.maximumf %148, %149 : vector<32x128xf32>
    %151 = vector.shape_cast %150 : vector<32x128xf32> to vector<2x16x128xf32>
    %cst_119 = arith.constant 0.000000e+00 : f32
    %152 = vector.broadcast %cst_119 : f32 to vector<2x32xf32>
    %153 = vector.extract_strided_slice %151 {offsets = [0, 0, 0], sizes = [2, 1, 128], strides = [1, 1, 1]} : vector<2x16x128xf32> to vector<2x1x128xf32>
    %154 = vector.shape_cast %153 : vector<2x1x128xf32> to vector<2x128xf32>
    %c0_120 = arith.constant 0 : index
    %c0_121 = arith.constant 0 : index
    %c0_122 = arith.constant 0 : index
    %155 = vector.load %arg6[%c0_120, %c0_121, %c0_122] : memref<3x128x32xf32, #tpu.memory_space<vmem>>, vector<1x128x32xf32>
    %156 = vector.shape_cast %155 : vector<1x128x32xf32> to vector<128x32xf32>
    %cst_123 = arith.constant dense<0.000000e+00> : vector<2x32xf32>
    %157 = tpu.matmul %154, %156, %cst_123 {dimension_numbers = #tpu.dot_dimension_numbers<[1], [0], [0], [1], [0, 0, 1, 1], [], []>} : vector<2x128xf32>, vector<128x32xf32>, vector<2x32xf32> -> vector<2x32xf32>
    %158 = arith.addf %152, %157 : vector<2x32xf32>
    %159 = vector.extract_strided_slice %151 {offsets = [0, 4, 0], sizes = [2, 1, 128], strides = [1, 1, 1]} : vector<2x16x128xf32> to vector<2x1x128xf32>
    %160 = vector.shape_cast %159 : vector<2x1x128xf32> to vector<2x128xf32>
    %c1_124 = arith.constant 1 : index
    %c0_125 = arith.constant 0 : index
    %c0_126 = arith.constant 0 : index
    %161 = vector.load %arg6[%c1_124, %c0_125, %c0_126] : memref<3x128x32xf32, #tpu.memory_space<vmem>>, vector<1x128x32xf32>
    %162 = vector.shape_cast %161 : vector<1x128x32xf32> to vector<128x32xf32>
    %cst_127 = arith.constant dense<0.000000e+00> : vector<2x32xf32>
    %163 = tpu.matmul %160, %162, %cst_127 {dimension_numbers = #tpu.dot_dimension_numbers<[1], [0], [0], [1], [0, 0, 1, 1], [], []>} : vector<2x128xf32>, vector<128x32xf32>, vector<2x32xf32> -> vector<2x32xf32>
    %164 = arith.addf %158, %163 : vector<2x32xf32>
    %165 = vector.extract_strided_slice %151 {offsets = [0, 8, 0], sizes = [2, 1, 128], strides = [1, 1, 1]} : vector<2x16x128xf32> to vector<2x1x128xf32>
    %166 = vector.shape_cast %165 : vector<2x1x128xf32> to vector<2x128xf32>
    %c2_128 = arith.constant 2 : index
    %c0_129 = arith.constant 0 : index
    %c0_130 = arith.constant 0 : index
    %167 = vector.load %arg6[%c2_128, %c0_129, %c0_130] : memref<3x128x32xf32, #tpu.memory_space<vmem>>, vector<1x128x32xf32>
    %168 = vector.shape_cast %167 : vector<1x128x32xf32> to vector<128x32xf32>
    %cst_131 = arith.constant dense<0.000000e+00> : vector<2x32xf32>
    %169 = tpu.matmul %166, %168, %cst_131 {dimension_numbers = #tpu.dot_dimension_numbers<[1], [0], [0], [1], [0, 0, 1, 1], [], []>} : vector<2x128xf32>, vector<128x32xf32>, vector<2x32xf32> -> vector<2x32xf32>
    %170 = arith.addf %164, %169 : vector<2x32xf32>
    %c0_132 = arith.constant 0 : index
    %c0_133 = arith.constant 0 : index
    %171 = vector.load %arg7[%c0_132, %c0_133] : memref<1x32xf32, #tpu.memory_space<vmem>>, vector<1x32xf32>
    %172 = vector.broadcast %171 : vector<1x32xf32> to vector<2x32xf32>
    %173 = arith.addf %170, %172 : vector<2x32xf32>
    %c0_134 = arith.constant 0 : index
    %c0_135 = arith.constant 0 : index
    %174 = vector.load %arg8[%c0_134, %c0_135] : memref<2x32xf32, #tpu.memory_space<vmem>>, vector<2x32xf32>
    tpu.vector_store %arg8[%c0_134, %c0_135], %173 {strides = array<i32>} : memref<2x32xf32, #tpu.memory_space<vmem>>, vector<2x32xf32>,
    return
  }
  func.func @transform_0(%arg0: i32) -> (i32, i32, i32, i32) {
    %c0_i32 = arith.constant 0 : i32
    %c0_i32_0 = arith.constant 0 : i32
    %c0_i32_1 = arith.constant 0 : i32
    %c0_i32_2 = arith.constant 0 : i32
    %c0_i32_3 = arith.constant 0 : i32
    return %c0_i32, %c0_i32_0, %c0_i32_1, %c0_i32_2 : i32, i32, i32, i32
  }
  func.func @transform_1(%arg0: i32) -> (i32, i32, i32, i32) {
    %c0_i32 = arith.constant 0 : i32
    %c0_i32_0 = arith.constant 0 : i32
    %c0_i32_1 = arith.constant 0 : i32
    %c0_i32_2 = arith.constant 0 : i32
    %c0_i32_3 = arith.constant 0 : i32
    return %c0_i32, %c0_i32_0, %c0_i32_1, %c0_i32_2 : i32, i32, i32, i32
  }
  func.func @transform_2(%arg0: i32) -> (i32, i32) {
    %c0_i32 = arith.constant 0 : i32
    %c0_i32_0 = arith.constant 0 : i32
    %c0_i32_1 = arith.constant 0 : i32
    return %c0_i32, %c0_i32_0 : i32, i32
  }
  func.func @transform_3(%arg0: i32) -> (i32, i32, i32) {
    %c0_i32 = arith.constant 0 : i32
    %c0_i32_0 = arith.constant 0 : i32
    %c0_i32_1 = arith.constant 0 : i32
    %c0_i32_2 = arith.constant 0 : i32
    return %c0_i32, %c0_i32_0, %c0_i32_1 : i32, i32, i32
  }
  func.func @transform_4(%arg0: i32) -> (i32, i32) {
    %c0_i32 = arith.constant 0 : i32
    %c0_i32_0 = arith.constant 0 : i32
    %c0_i32_1 = arith.constant 0 : i32
    return %c0_i32, %c0_i32_0 : i32, i32
  }
  func.func @transform_5(%arg0: i32) -> (i32, i32, i32) {
    %c0_i32 = arith.constant 0 : i32
    %c0_i32_0 = arith.constant 0 : i32
    %c0_i32_1 = arith.constant 0 : i32
    %c0_i32_2 = arith.constant 0 : i32
    return %c0_i32, %c0_i32_0, %c0_i32_1 : i32, i32, i32
  }
  func.func @transform_6(%arg0: i32) -> (i32, i32) {
    %c0_i32 = arith.constant 0 : i32
    %c0_i32_0 = arith.constant 0 : i32
    %c0_i32_1 = arith.constant 0 : i32
    return %c0_i32, %c0_i32_0 : i32, i32
  }
  func.func @transform_7(%arg0: i32) -> (i32, i32) {
    %c0_i32 = arith.constant 0 : i32
    %c0_i32_0 = arith.constant 0 : i32
    %c0_i32_1 = arith.constant 0 : i32
    return %c0_i32, %c0_i32_0 : i32, i32
  }
}

</mosaic_0001>

<llo_original>
// kernel: tpu_custom_call.1
$region0: #{tpu_custom_call.1}
  #allocation0 [shape = 'u32[]', space=smem, size = 0x4, offset = 0x4, fixed_abs, tag = 'smem constant byte address 0x4 - core index']
  #allocation1 [shape = 'u32[72,128]{1,0:T(1,128)}', space=vmem, size = 0x9000, scoped, tag = 'internal scratch']
  %s0 = inlined_call_operand.hbm [shape: f32[2,4,16,16], index: 0, kind: input, shape index: {}]
  %s1 = inlined_call_operand.hbm [shape: f32[3,4,16,128], index: 1, kind: input, shape index: {}]
  %s2 = inlined_call_operand.vmem [shape: f32[1,128], index: 2, kind: input, shape index: {}]
  %s3 = inlined_call_operand.vmem [shape: f32[3,128,128], index: 3, kind: input, shape index: {}]
  %s4 = inlined_call_operand.vmem [shape: f32[1,128], index: 4, kind: input, shape index: {}]
  %s5 = inlined_call_operand.vmem [shape: f32[3,128,32], index: 5, kind: input, shape index: {}]
  %s6 = inlined_call_operand.vmem [shape: f32[1,32], index: 6, kind: input, shape index: {}]
  %s7 = inlined_call_operand.hbm [shape: f32[2,32], index: 7, kind: output, shape index: {}]
  %s8 = sld [smem:[#allocation0]]
  $region46: #{tpu_custom_call.1} parent=0
    _
  %s10 = ssub.s32 1, %s8
  %s11 = scalar_select 0, %s10, %s8
  $region1: #{tpu_custom_call.1} parent=0
    #allocation2 [shape = 'u8[65536]{0}', space=vmem, size = 0x10000, scoped, tag = 'input window, operand 0, single buffered']
    #allocation3 [shape = 's32[1]{0}', space=sflag, size = 0x4, scoped, tag = 'scoped memory for tpu_custom_call.1']
    #allocation4 [shape = 's32[1]{0}', space=sflag, size = 0x4, scoped, tag = 'scoped memory for tpu_custom_call.1']
    #allocation5 [shape = 'u8[98304]{0}', space=vmem, size = 0x18000, scoped, tag = 'input window, operand 1, single buffered']
    #allocation6 [shape = 's32[1]{0}', space=sflag, size = 0x4, scoped, tag = 'scoped memory for tpu_custom_call.1']
    #allocation7 [shape = 'u8[1024]{0}', space=vmem, size = 0x400, scoped, tag = 'output window, operand 0, single buffered']
    %12 = vsyncpa [#allocation3], 0
    %13 = vsyncpa [#allocation6], 0
    %14 = vsyncpa [#allocation4], 0
    // Predicated region
    $region2: #{tpu_custom_call.1} parent=1 // pred_check
      _
    $region3: #{tpu_custom_call.1} parent=1 // pred_check_branch
      %16 = sbr.rel (0) target = $region5
    $region4: #{tpu_custom_call.1} parent=1 // pred_region
      %18 = vsyncadd [#allocation3], 0
      %s19 = sshll.u32 %s0, 4
      %s20 = int_to_ptr.hbm [resolvable:$true] %s19
      %s21 = sshll.u32 [#allocation2], 4
      %s22 = int_to_ptr.vmem [resolvable:$true] %s21
      %27 = dma.hbm_to_vmem [thread:$0]  %s20, 2048, %s22, [#allocation3], 128, 128, 8
    $region5: #{tpu_custom_call.1} parent=1 // pred_fallthru
      _
    // Predicated region
    $region6: #{tpu_custom_call.1} parent=1 // pred_check
      _
    $region7: #{tpu_custom_call.1} parent=1 // pred_check_branch
      %29 = sbr.rel (0) target = $region9
    $region8: #{tpu_custom_call.1} parent=1 // pred_region
      %31 = vsyncadd [#allocation6], 0
      %s32 = sshll.u32 %s1, 4
      %s33 = int_to_ptr.hbm [resolvable:$true] %s32
      %s34 = sshll.u32 [#allocation5], 4
      %s35 = int_to_ptr.vmem [resolvable:$true] %s34
      %40 = dma.hbm_to_vmem [thread:$0]  %s33, 3072, %s35, [#allocation6], 128, 128, 8
    $region9: #{tpu_custom_call.1} parent=1 // pred_fallthru
      _
    // Predicated region
    $region10: #{tpu_custom_call.1} parent=1 // pred_check
      _
    $region11: #{tpu_custom_call.1} parent=1 // pred_check_branch
      %42 = sbr.rel (0) target = $region13
    $region12: #{tpu_custom_call.1} parent=1 // pred_region
      _
    $region13: #{tpu_custom_call.1} parent=1 // pred_fallthru
      _
    // Predicated region
    $region14: #{tpu_custom_call.1} parent=1 // pred_check
      _
    $region15: #{tpu_custom_call.1} parent=1 // pred_check_branch
      %44 = sbr.rel (0) target = $region17
    $region16: #{tpu_custom_call.1} parent=1 // pred_region
      _
    $region17: #{tpu_custom_call.1} parent=1 // pred_fallthru
      _
    // Predicated region
    $region18: #{tpu_custom_call.1} parent=1 // pred_check
      _
    $region19: #{tpu_custom_call.1} parent=1 // pred_check_branch
      %46 = sbr.rel (0) target = $region21
    $region20: #{tpu_custom_call.1} parent=1 // pred_region
      _
    $region21: #{tpu_custom_call.1} parent=1 // pred_fallthru
      _
    // Predicated region
    $region22: #{tpu_custom_call.1} parent=1 // pred_check
      _
    $region23: #{tpu_custom_call.1} parent=1 // pred_check_branch
      %48 = sbr.rel (0) target = $region25
    $region24: #{tpu_custom_call.1} parent=1 // pred_region
      _
    $region25: #{tpu_custom_call.1} parent=1 // pred_fallthru
      _
    // Predicated region
    $region26: #{tpu_custom_call.1} parent=1 // pred_check
      _
    $region27: #{tpu_custom_call.1} parent=1 // pred_check_branch
      %50 = sbr.rel (0) target = $region29
    $region28: #{tpu_custom_call.1} parent=1 // pred_region
      _
    $region29: #{tpu_custom_call.1} parent=1 // pred_fallthru
      _
    // Predicated region
    $region30: #{tpu_custom_call.1} parent=1 // pred_check
      _
    $region31: #{tpu_custom_call.1} parent=1 // pred_check_branch
      %52 = sbr.rel (0) target = $region33
    $region32: #{tpu_custom_call.1} parent=1 // pred_region
      %54 = dma.done [#allocation3], 2048
    $region33: #{tpu_custom_call.1} parent=1 // pred_fallthru
      _
    // Predicated region
    $region34: #{tpu_custom_call.1} parent=1 // pred_check
      _
    $region35: #{tpu_custom_call.1} parent=1 // pred_check_branch
      %56 = sbr.rel (0) target = $region37
    $region36: #{tpu_custom_call.1} parent=1 // pred_region
      %58 = dma.done [#allocation6], 3072
    $region37: #{tpu_custom_call.1} parent=1 // pred_fallthru
      _
    %v59 = vlaneseq
    %v60 = vshrl.u32 %v59, 7
    %v61 = vadd.s32 %v60, 8
    %v62 = vadd.s32 %v60, 16
    %v63 = vadd.s32 %v60, 24
    %vm64 = vcmp.lt.s32.totalorder %v60, 0
    %v65 = vsub.s32 0, %v60
    %v66 = vsel %vm64, %v65, %v60
    %v67 = vshrl.u32 %v66, 4
    %v68 = vand.u32 %v66, 15
    %v69 = vsub.s32 0, %v68
    %v70 = vsel %vm64, %v69, %v68
    %vm71 = vcmp.lt.s32.totalorder %v61, 0
    %v72 = vsub.s32 0, %v61
    %v73 = vsel %vm71, %v72, %v61
    %v74 = vshrl.u32 %v73, 4
    %v75 = vand.u32 %v73, 15
    %v76 = vsub.s32 0, %v75
    %v77 = vsel %vm71, %v76, %v75
    %vm78 = vcmp.lt.s32.totalorder %v62, 0
    %v79 = vsub.s32 0, %v62
    %v80 = vsel %vm78, %v79, %v62
    %v81 = vshrl.u32 %v80, 4
    %v82 = vand.u32 %v80, 15
    %v83 = vsub.s32 0, %v82
    %v84 = vsel %vm78, %v83, %v82
    %vm85 = vcmp.lt.s32.totalorder %v63, 0
    %v86 = vsub.s32 0, %v63
    %v87 = vsel %vm85, %v86, %v63
    %v88 = vshrl.u32 %v87, 4
    %v89 = vand.u32 %v87, 15
    %v90 = vsub.s32 0, %v89
    %v91 = vsel %vm85, %v90, %v89
    %vm92 = vcmp.ne.s32.totalorder %v70, 0
    %vm93 = vcmp.ne.s32.totalorder %v77, 0
    %vm94 = vcmp.ne.s32.totalorder %v84, 0
    %vm95 = vcmp.ne.s32.totalorder %v91, 0
    %vm96 = vcmp.lt.s32.totalorder %v70, 0
    %vm97 = vcmp.lt.s32.totalorder %v77, 0
    %vm98 = vcmp.lt.s32.totalorder %v84, 0
    %vm99 = vcmp.lt.s32.totalorder %v91, 0
    %vm100 = vmand %vm96, %vm92
    %vm101 = vmand %vm97, %vm93
    %vm102 = vmand %vm98, %vm94
    %vm103 = vmand %vm99, %vm95
    %v104 = vadd.s32 %v70, 16
    %v105 = vadd.s32 %v77, 16
    %v106 = vadd.s32 %v84, 16
    %v107 = vadd.s32 %v91, 16
    %v108 = vsel %vm100, %v104, %v70
    %v109 = vsel %vm101, %v105, %v77
    %v110 = vsel %vm102, %v106, %v84
    %v111 = vsel %vm103, %v107, %v91
    %v112 = vld [vmem:[#allocation2] sm:$0xff]
    %v113 = vld [vmem:[#allocation2 + $0x8] sm:$0xff]
    %v114 = vld [vmem:[#allocation2 + $0x40] sm:$0xff]
    %v115 = vld [vmem:[#allocation2 + $0x48] sm:$0xff]
    %v116 = vrot.slane %v112, 7
    %v117 = vrot.slane %v113, 7
    %v118 = vrot.slane %v114, 7
    %v119 = vrot.slane %v115, 7
    %vm120 = vcmp.lt.s32.totalorder %v60, 1
    %v121 = vsel %vm120, %v118, %v119
    %v122 = vsel %vm120, %v117, %v118
    %v123 = vsel %vm120, %v116, %v117
    %v124 = vsel %vm120, %v119, %v116
    %vm125 = vcmp.ge.s32.totalorder %v108, 1
    %vm126 = vcmp.ge.s32.totalorder %v109, 1
    %vm127 = vcmp.ge.s32.totalorder %v110, 1
    %vm128 = vcmp.ge.s32.totalorder %v111, 1
    %v129 = vsel %vm125, %v124, 0.0
    %v130 = vsel %vm126, %v123, 0.0
    %v131 = vsel %vm127, %v122, 0.0
    %v132 = vsel %vm128, %v121, 0.0
    %v133 = vld [vmem:[#allocation5] sm:$0xff]
    %v134 = vld [vmem:[#allocation5 + $0x8] sm:$0xff]
    %s135 = scalar_lea.vmem [#allocation5], 64
    %v136 = vld [vmem:[%s135] sm:$0xff]
    %v137 = vld [vmem:[%s135 + $0x8] sm:$0xff]
    %vm138 = vcmask 130048
    %v140 = vsel %vm138, %v112, 0
    %v143 = vsel %vm138, %v113, 0
    %v146 = vsel %vm138, %v114, 0
    %v149 = vsel %vm138, %v115, 0
    %151 = vmatpush.msra.mxu0 0.0
    %152 = vmatpush.msra.mxu0 0.0
    %153 = vmatpush.msra.mxu0 0.0
    %154 = vmatpush.msra.mxu0 0.0
    %155 = vmatpush.msra.mxu0 0.0
    %156 = vmatpush.msra.mxu0 0.0
    %157 = vmatpush.msra.mxu0 0.0
    %158 = vmatpush.msra.mxu0 0.0
    %159 = vmatpush.msra.mxu0 0.0
    %160 = vmatpush.msra.mxu0 0.0
    %161 = vmatpush.msra.mxu0 0.0
    %162 = vmatpush.msra.mxu0 0.0
    %163 = vmatpush.msra.mxu0 0.0
    %164 = vmatpush.msra.mxu0 0.0
    %165 = vmatpush.msra.mxu0 %v137
    %166 = vmatpush.msra.mxu0 %v136
    %167 = vmatmul.f32.gmra.mxu0 %v140
    %v168 = vpop.f32.mrf.mxu0
    %v169 = vadd.f32 0.0, %v168
    %170 = vmatmul.f32.gmra.mxu0 %v143
    %v171 = vpop.f32.mrf.mxu0
    %v172 = vadd.f32 0.0, %v171
    %173 = vmatmul.f32.gmra.mxu0 %v146
    %v174 = vpop.f32.mrf.mxu0
    %v175 = vadd.f32 0.0, %v174
    %176 = vmatmul.f32.gmra.mxu0 %v149
    %v177 = vpop.f32.mrf.mxu0
    %v178 = vadd.f32 0.0, %v177
    %179 = vdwg.mxu0
    %v181 = vsel %vm138, %v129, 0
    %v184 = vsel %vm138, %v130, 0
    %v187 = vsel %vm138, %v131, 0
    %v190 = vsel %vm138, %v132, 0
    %192 = vmatpush.msra.mxu0 0.0
    %193 = vmatpush.msra.mxu0 0.0
    %194 = vmatpush.msra.mxu0 0.0
    %195 = vmatpush.msra.mxu0 0.0
    %196 = vmatpush.msra.mxu0 0.0
    %197 = vmatpush.msra.mxu0 0.0
    %198 = vmatpush.msra.mxu0 0.0
    %199 = vmatpush.msra.mxu0 0.0
    %200 = vmatpush.msra.mxu0 0.0
    %201 = vmatpush.msra.mxu0 0.0
    %202 = vmatpush.msra.mxu0 0.0
    %203 = vmatpush.msra.mxu0 0.0
    %204 = vmatpush.msra.mxu0 0.0
    %205 = vmatpush.msra.mxu0 0.0
    %206 = vmatpush.msra.mxu0 %v134
    %207 = vmatpush.msra.mxu0 %v133
    %208 = vmatmul.f32.gmra.mxu0 %v181
    %v209 = vpop.f32.mrf.mxu0
    %v210 = vadd.f32 %v169, %v209
    %211 = vmatmul.f32.gmra.mxu0 %v184
    %v212 = vpop.f32.mrf.mxu0
    %v213 = vadd.f32 %v172, %v212
    %214 = vmatmul.f32.gmra.mxu0 %v187
    %v215 = vpop.f32.mrf.mxu0
    %v216 = vadd.f32 %v175, %v215
    %217 = vmatmul.f32.gmra.mxu0 %v190
    %v218 = vpop.f32.mrf.mxu0
    %v219 = vadd.f32 %v178, %v218
    %220 = vdwg.mxu0
    %v221 = vrot.slane %v112, 1
    %v222 = vrot.slane %v113, 1
    %v223 = vrot.slane %v114, 1
    %v224 = vrot.slane %v115, 1
    %vm225 = vcmp.lt.s32.totalorder %v60, 7
    %v226 = vsel %vm225, %v223, %v224
    %v227 = vsel %vm225, %v222, %v223
    %v228 = vsel %vm225, %v221, %v222
    %v229 = vsel %vm225, %v224, %v221
    %vm230 = vcmp.lt.s32.totalorder %v108, 15
    %vm231 = vcmp.lt.s32.totalorder %v109, 15
    %vm232 = vcmp.lt.s32.totalorder %v110, 15
    %vm233 = vcmp.lt.s32.totalorder %v111, 15
    %v234 = vsel %vm230, %v228, 0.0
    %v235 = vsel %vm231, %v227, 0.0
    %v236 = vsel %vm232, %v226, 0.0
    %v237 = vsel %vm233, %v229, 0.0
    %s238 = scalar_lea.vmem [#allocation5], 128
    %v239 = vld [vmem:[%s238] sm:$0xff]
    %v240 = vld [vmem:[%s238 + $0x8] sm:$0xff]
    %v242 = vsel %vm138, %v234, 0
    %v245 = vsel %vm138, %v235, 0
    %v248 = vsel %vm138, %v236, 0
    %v251 = vsel %vm138, %v237, 0
    %253 = vmatpush.msra.mxu0 0.0
    %254 = vmatpush.msra.mxu0 0.0
    %255 = vmatpush.msra.mxu0 0.0
    %256 = vmatpush.msra.mxu0 0.0
    %257 = vmatpush.msra.mxu0 0.0
    %258 = vmatpush.msra.mxu0 0.0
    %259 = vmatpush.msra.mxu0 0.0
    %260 = vmatpush.msra.mxu0 0.0
    %261 = vmatpush.msra.mxu0 0.0
    %262 = vmatpush.msra.mxu0 0.0
    %263 = vmatpush.msra.mxu0 0.0
    %264 = vmatpush.msra.mxu0 0.0
    %265 = vmatpush.msra.mxu0 0.0
    %266 = vmatpush.msra.mxu0 0.0
    %267 = vmatpush.msra.mxu0 %v240
    %268 = vmatpush.msra.mxu0 %v239
    %269 = vmatmul.f32.gmra.mxu0 %v242
    %v270 = vpop.f32.mrf.mxu0
    %v271 = vadd.f32 0.0, %v270
    %272 = vmatmul.f32.gmra.mxu0 %v245
    %v273 = vpop.f32.mrf.mxu0
    %v274 = vadd.f32 0.0, %v273
    %275 = vmatmul.f32.gmra.mxu0 %v248
    %v276 = vpop.f32.mrf.mxu0
    %v277 = vadd.f32 0.0, %v276
    %278 = vmatmul.f32.gmra.mxu0 %v251
    %v279 = vpop.f32.mrf.mxu0
    %v280 = vadd.f32 0.0, %v279
    %281 = vdwg.mxu0
    %v282 = vadd.f32 %v210, %v271
    %v283 = vadd.f32 %v213, %v274
    %v284 = vadd.f32 %v216, %v277
    %v285 = vadd.f32 %v219, %v280
    %s286 = scalar_lea.vmem [#allocation2], 16
    %v287 = vld [vmem:[%s286] sm:$0xff]
    %v288 = vld [vmem:[%s286 + $0x8] sm:$0xff]
    %v289 = vld [vmem:[%s286 + $0x40] sm:$0xff]
    %v290 = vld [vmem:[%s286 + $0x48] sm:$0xff]
    %v291 = vrot.slane %v287, 7
    %v292 = vrot.slane %v288, 7
    %v293 = vrot.slane %v289, 7
    %v294 = vrot.slane %v290, 7
    %v295 = vsel %vm120, %v293, %v294
    %v296 = vsel %vm120, %v292, %v293
    %v297 = vsel %vm120, %v291, %v292
    %v298 = vsel %vm120, %v294, %v291
    %v299 = vsel %vm125, %v298, 0.0
    %v300 = vsel %vm126, %v297, 0.0
    %v301 = vsel %vm127, %v296, 0.0
    %v302 = vsel %vm128, %v295, 0.0
    %s303 = scalar_lea.vmem [#allocation5], 16
    %v304 = vld [vmem:[%s303] sm:$0xff]
    %v305 = vld [vmem:[%s303 + $0x8] sm:$0xff]
    %v307 = vsel %vm138, %v299, 0
    %v310 = vsel %vm138, %v300, 0
    %v313 = vsel %vm138, %v301, 0
    %v316 = vsel %vm138, %v302, 0
    %318 = vmatpush.msra.mxu0 0.0
    %319 = vmatpush.msra.mxu0 0.0
    %320 = vmatpush.msra.mxu0 0.0
    %321 = vmatpush.msra.mxu0 0.0
    %322 = vmatpush.msra.mxu0 0.0
    %323 = vmatpush.msra.mxu0 0.0
    %324 = vmatpush.msra.mxu0 0.0
    %325 = vmatpush.msra.mxu0 0.0
    %326 = vmatpush.msra.mxu0 0.0
    %327 = vmatpush.msra.mxu0 0.0
    %328 = vmatpush.msra.mxu0 0.0
    %329 = vmatpush.msra.mxu0 0.0
    %330 = vmatpush.msra.mxu0 0.0
    %331 = vmatpush.msra.mxu0 0.0
    %332 = vmatpush.msra.mxu0 %v305
    %333 = vmatpush.msra.mxu0 %v304
    %334 = vmatmul.f32.gmra.mxu0 %v307
    %v335 = vpop.f32.mrf.mxu0
    %v336 = vadd.f32 0.0, %v335
    %337 = vmatmul.f32.gmra.mxu0 %v310
    %v338 = vpop.f32.mrf.mxu0
    %v339 = vadd.f32 0.0, %v338
    %340 = vmatmul.f32.gmra.mxu0 %v313
    %v341 = vpop.f32.mrf.mxu0
    %v342 = vadd.f32 0.0, %v341
    %343 = vmatmul.f32.gmra.mxu0 %v316
    %v344 = vpop.f32.mrf.mxu0
    %v345 = vadd.f32 0.0, %v344
    %346 = vdwg.mxu0
    %v347 = vadd.f32 %v282, %v336
    %v348 = vadd.f32 %v283, %v339
    %v349 = vadd.f32 %v284, %v342
    %v350 = vadd.f32 %v285, %v345
    %s351 = scalar_lea.vmem [#allocation5], 80
    %v352 = vld [vmem:[%s351] sm:$0xff]
    %v353 = vld [vmem:[%s351 + $0x8] sm:$0xff]
    %v355 = vsel %vm138, %v287, 0
    %v358 = vsel %vm138, %v288, 0
    %v361 = vsel %vm138, %v289, 0
    %v364 = vsel %vm138, %v290, 0
    %366 = vmatpush.msra.mxu0 0.0
    %367 = vmatpush.msra.mxu0 0.0
    %368 = vmatpush.msra.mxu0 0.0
    %369 = vmatpush.msra.mxu0 0.0
    %370 = vmatpush.msra.mxu0 0.0
    %371 = vmatpush.msra.mxu0 0.0
    %372 = vmatpush.msra.mxu0 0.0
    %373 = vmatpush.msra.mxu0 0.0
    %374 = vmatpush.msra.mxu0 0.0
    %375 = vmatpush.msra.mxu0 0.0
    %376 = vmatpush.msra.mxu0 0.0
    %377 = vmatpush.msra.mxu0 0.0
    %378 = vmatpush.msra.mxu0 0.0
    %379 = vmatpush.msra.mxu0 0.0
    %380 = vmatpush.msra.mxu0 %v353
    %381 = vmatpush.msra.mxu0 %v352
    %382 = vmatmul.f32.gmra.mxu0 %v355
    %v383 = vpop.f32.mrf.mxu0
    %v384 = vadd.f32 0.0, %v383
    %385 = vmatmul.f32.gmra.mxu0 %v358
    %v386 = vpop.f32.mrf.mxu0
    %v387 = vadd.f32 0.0, %v386
    %388 = vmatmul.f32.gmra.mxu0 %v361
    %v389 = vpop.f32.mrf.mxu0
    %v390 = vadd.f32 0.0, %v389
    %391 = vmatmul.f32.gmra.mxu0 %v364
    %v392 = vpop.f32.mrf.mxu0
    %v393 = vadd.f32 0.0, %v392
    %394 = vdwg.mxu0
    %v395 = vadd.f32 %v347, %v384
    %v396 = vadd.f32 %v348, %v387
    %v397 = vadd.f32 %v349, %v390
    %v398 = vadd.f32 %v350, %v393
    %v399 = vrot.slane %v287, 1
    %v400 = vrot.slane %v288, 1
    %v401 = vrot.slane %v289, 1
    %v402 = vrot.slane %v290, 1
    %v403 = vsel %vm225, %v401, %v402
    %v404 = vsel %vm225, %v400, %v401
    %v405 = vsel %vm225, %v399, %v400
    %v406 = vsel %vm225, %v402, %v399
    %v407 = vsel %vm230, %v405, 0.0
    %v408 = vsel %vm231, %v404, 0.0
    %v409 = vsel %vm232, %v403, 0.0
    %v410 = vsel %vm233, %v406, 0.0
    %s411 = scalar_lea.vmem [#allocation5], 144
    %v412 = vld [vmem:[%s411] sm:$0xff]
    %v413 = vld [vmem:[%s411 + $0x8] sm:$0xff]
    %v415 = vsel %vm138, %v407, 0
    %v418 = vsel %vm138, %v408, 0
    %v421 = vsel %vm138, %v409, 0
    %v424 = vsel %vm138, %v410, 0
    %426 = vmatpush.msra.mxu0 0.0
    %427 = vmatpush.msra.mxu0 0.0
    %428 = vmatpush.msra.mxu0 0.0
    %429 = vmatpush.msra.mxu0 0.0
    %430 = vmatpush.msra.mxu0 0.0
    %431 = vmatpush.msra.mxu0 0.0
    %432 = vmatpush.msra.mxu0 0.0
    %433 = vmatpush.msra.mxu0 0.0
    %434 = vmatpush.msra.mxu0 0.0
    %435 = vmatpush.msra.mxu0 0.0
    %436 = vmatpush.msra.mxu0 0.0
    %437 = vmatpush.msra.mxu0 0.0
    %438 = vmatpush.msra.mxu0 0.0
    %439 = vmatpush.msra.mxu0 0.0
    %440 = vmatpush.msra.mxu0 %v413
    %441 = vmatpush.msra.mxu0 %v412
    %442 = vmatmul.f32.gmra.mxu0 %v415
    %v443 = vpop.f32.mrf.mxu0
    %v444 = vadd.f32 0.0, %v443
    %445 = vmatmul.f32.gmra.mxu0 %v418
    %v446 = vpop.f32.mrf.mxu0
    %v447 = vadd.f32 0.0, %v446
    %448 = vmatmul.f32.gmra.mxu0 %v421
    %v449 = vpop.f32.mrf.mxu0
    %v450 = vadd.f32 0.0, %v449
    %451 = vmatmul.f32.gmra.mxu0 %v424
    %v452 = vpop.f32.mrf.mxu0
    %v453 = vadd.f32 0.0, %v452
    %454 = vdwg.mxu0
    %v455 = vadd.f32 %v395, %v444
    %v456 = vadd.f32 %v396, %v447
    %v457 = vadd.f32 %v397, %v450
    %v458 = vadd.f32 %v398, %v453
    %s459 = scalar_lea.vmem [#allocation2], 32
    %v460 = vld [vmem:[%s459] sm:$0xff]
    %v461 = vld [vmem:[%s459 + $0x8] sm:$0xff]
    %v462 = vld [vmem:[%s459 + $0x40] sm:$0xff]
    %v463 = vld [vmem:[%s459 + $0x48] sm:$0xff]
    %v464 = vrot.slane %v460, 7
    %v465 = vrot.slane %v461, 7
    %v466 = vrot.slane %v462, 7
    %v467 = vrot.slane %v463, 7
    %v468 = vsel %vm120, %v466, %v467
    %v469 = vsel %vm120, %v465, %v466
    %v470 = vsel %vm120, %v464, %v465
    %v471 = vsel %vm120, %v467, %v464
    %v472 = vsel %vm125, %v471, 0.0
    %v473 = vsel %vm126, %v470, 0.0
    %v474 = vsel %vm127, %v469, 0.0
    %v475 = vsel %vm128, %v468, 0.0
    %s476 = scalar_lea.vmem [#allocation5], 32
    %v477 = vld [vmem:[%s476] sm:$0xff]
    %v478 = vld [vmem:[%s476 + $0x8] sm:$0xff]
    %v480 = vsel %vm138, %v472, 0
    %v483 = vsel %vm138, %v473, 0
    %v486 = vsel %vm138, %v474, 0
    %v489 = vsel %vm138, %v475, 0
    %491 = vmatpush.msra.mxu0 0.0
    %492 = vmatpush.msra.mxu0 0.0
    %493 = vmatpush.msra.mxu0 0.0
    %494 = vmatpush.msra.mxu0 0.0
    %495 = vmatpush.msra.mxu0 0.0
    %496 = vmatpush.msra.mxu0 0.0
    %497 = vmatpush.msra.mxu0 0.0
    %498 = vmatpush.msra.mxu0 0.0
    %499 = vmatpush.msra.mxu0 0.0
    %500 = vmatpush.msra.mxu0 0.0
    %501 = vmatpush.msra.mxu0 0.0
    %502 = vmatpush.msra.mxu0 0.0
    %503 = vmatpush.msra.mxu0 0.0
    %504 = vmatpush.msra.mxu0 0.0
    %505 = vmatpush.msra.mxu0 %v478
    %506 = vmatpush.msra.mxu0 %v477
    %507 = vmatmul.f32.gmra.mxu0 %v480
    %v508 = vpop.f32.mrf.mxu0
    %v509 = vadd.f32 0.0, %v508
    %510 = vmatmul.f32.gmra.mxu0 %v483
    %v511 = vpop.f32.mrf.mxu0
    %v512 = vadd.f32 0.0, %v511
    %513 = vmatmul.f32.gmra.mxu0 %v486
    %v514 = vpop.f32.mrf.mxu0
    %v515 = vadd.f32 0.0, %v514
    %516 = vmatmul.f32.gmra.mxu0 %v489
    %v517 = vpop.f32.mrf.mxu0
    %v518 = vadd.f32 0.0, %v517
    %519 = vdwg.mxu0
    %v520 = vadd.f32 %v455, %v509
    %v521 = vadd.f32 %v456, %v512
    %v522 = vadd.f32 %v457, %v515
    %v523 = vadd.f32 %v458, %v518
    %s524 = scalar_lea.vmem [#allocation5], 96
    %v525 = vld [vmem:[%s524] sm:$0xff]
    %v526 = vld [vmem:[%s524 + $0x8] sm:$0xff]
    %v528 = vsel %vm138, %v460, 0
    %v531 = vsel %vm138, %v461, 0
    %v534 = vsel %vm138, %v462, 0
    %v537 = vsel %vm138, %v463, 0
    %539 = vmatpush.msra.mxu0 0.0
    %540 = vmatpush.msra.mxu0 0.0
    %541 = vmatpush.msra.mxu0 0.0
    %542 = vmatpush.msra.mxu0 0.0
    %543 = vmatpush.msra.mxu0 0.0
    %544 = vmatpush.msra.mxu0 0.0
    %545 = vmatpush.msra.mxu0 0.0
    %546 = vmatpush.msra.mxu0 0.0
    %547 = vmatpush.msra.mxu0 0.0
    %548 = vmatpush.msra.mxu0 0.0
    %549 = vmatpush.msra.mxu0 0.0
    %550 = vmatpush.msra.mxu0 0.0
    %551 = vmatpush.msra.mxu0 0.0
    %552 = vmatpush.msra.mxu0 0.0
    %553 = vmatpush.msra.mxu0 %v526
    %554 = vmatpush.msra.mxu0 %v525
    %555 = vmatmul.f32.gmra.mxu0 %v528
    %v556 = vpop.f32.mrf.mxu0
    %v557 = vadd.f32 0.0, %v556
    %558 = vmatmul.f32.gmra.mxu0 %v531
    %v559 = vpop.f32.mrf.mxu0
    %v560 = vadd.f32 0.0, %v559
    %561 = vmatmul.f32.gmra.mxu0 %v534
    %v562 = vpop.f32.mrf.mxu0
    %v563 = vadd.f32 0.0, %v562
    %564 = vmatmul.f32.gmra.mxu0 %v537
    %v565 = vpop.f32.mrf.mxu0
    %v566 = vadd.f32 0.0, %v565
    %567 = vdwg.mxu0
    %v568 = vadd.f32 %v520, %v557
    %v569 = vadd.f32 %v521, %v560
    %v570 = vadd.f32 %v522, %v563
    %v571 = vadd.f32 %v523, %v566
    %v572 = vrot.slane %v460, 1
    %v573 = vrot.slane %v461, 1
    %v574 = vrot.slane %v462, 1
    %v575 = vrot.slane %v463, 1
    %v576 = vsel %vm225, %v574, %v575
    %v577 = vsel %vm225, %v573, %v574
    %v578 = vsel %vm225, %v572, %v573
    %v579 = vsel %vm225, %v575, %v572
    %v580 = vsel %vm230, %v578, 0.0
    %v581 = vsel %vm231, %v577, 0.0
    %v582 = vsel %vm232, %v576, 0.0
    %v583 = vsel %vm233, %v579, 0.0
    %s584 = scalar_lea.vmem [#allocation5], 160
    %v585 = vld [vmem:[%s584] sm:$0xff]
    %v586 = vld [vmem:[%s584 + $0x8] sm:$0xff]
    %v588 = vsel %vm138, %v580, 0
    %v591 = vsel %vm138, %v581, 0
    %v594 = vsel %vm138, %v582, 0
    %v597 = vsel %vm138, %v583, 0
    %599 = vmatpush.msra.mxu0 0.0
    %600 = vmatpush.msra.mxu0 0.0
    %601 = vmatpush.msra.mxu0 0.0
    %602 = vmatpush.msra.mxu0 0.0
    %603 = vmatpush.msra.mxu0 0.0
    %604 = vmatpush.msra.mxu0 0.0
    %605 = vmatpush.msra.mxu0 0.0
    %606 = vmatpush.msra.mxu0 0.0
    %607 = vmatpush.msra.mxu0 0.0
    %608 = vmatpush.msra.mxu0 0.0
    %609 = vmatpush.msra.mxu0 0.0
    %610 = vmatpush.msra.mxu0 0.0
    %611 = vmatpush.msra.mxu0 0.0
    %612 = vmatpush.msra.mxu0 0.0
    %613 = vmatpush.msra.mxu0 %v586
    %614 = vmatpush.msra.mxu0 %v585
    %615 = vmatmul.f32.gmra.mxu0 %v588
    %v616 = vpop.f32.mrf.mxu0
    %v617 = vadd.f32 0.0, %v616
    %618 = vmatmul.f32.gmra.mxu0 %v591
    %v619 = vpop.f32.mrf.mxu0
    %v620 = vadd.f32 0.0, %v619
    %621 = vmatmul.f32.gmra.mxu0 %v594
    %v622 = vpop.f32.mrf.mxu0
    %v623 = vadd.f32 0.0, %v622
    %624 = vmatmul.f32.gmra.mxu0 %v597
    %v625 = vpop.f32.mrf.mxu0
    %v626 = vadd.f32 0.0, %v625
    %627 = vdwg.mxu0
    %v628 = vadd.f32 %v568, %v617
    %v629 = vadd.f32 %v569, %v620
    %v630 = vadd.f32 %v570, %v623
    %v631 = vadd.f32 %v571, %v626
    %s632 = scalar_lea.vmem [#allocation2], 48
    %v633 = vld [vmem:[%s632] sm:$0xff]
    %v634 = vld [vmem:[%s632 + $0x8] sm:$0xff]
    %v635 = vld [vmem:[%s632 + $0x40] sm:$0xff]
    %v636 = vld [vmem:[%s632 + $0x48] sm:$0xff]
    %v637 = vrot.slane %v633, 7
    %v638 = vrot.slane %v634, 7
    %v639 = vrot.slane %v635, 7
    %v640 = vrot.slane %v636, 7
    %v641 = vsel %vm120, %v639, %v640
    %v642 = vsel %vm120, %v638, %v639
    %v643 = vsel %vm120, %v637, %v638
    %v644 = vsel %vm120, %v640, %v637
    %v645 = vsel %vm125, %v644, 0.0
    %v646 = vsel %vm126, %v643, 0.0
    %v647 = vsel %vm127, %v642, 0.0
    %v648 = vsel %vm128, %v641, 0.0
    %s649 = scalar_lea.vmem [#allocation5], 48
    %v650 = vld [vmem:[%s649] sm:$0xff]
    %v651 = vld [vmem:[%s649 + $0x8] sm:$0xff]
    %v653 = vsel %vm138, %v645, 0
    %v656 = vsel %vm138, %v646, 0
    %v659 = vsel %vm138, %v647, 0
    %v662 = vsel %vm138, %v648, 0
    %664 = vmatpush.msra.mxu0 0.0
    %665 = vmatpush.msra.mxu0 0.0
    %666 = vmatpush.msra.mxu0 0.0
    %667 = vmatpush.msra.mxu0 0.0
    %668 = vmatpush.msra.mxu0 0.0
    %669 = vmatpush.msra.mxu0 0.0
    %670 = vmatpush.msra.mxu0 0.0
    %671 = vmatpush.msra.mxu0 0.0
    %672 = vmatpush.msra.mxu0 0.0
    %673 = vmatpush.msra.mxu0 0.0
    %674 = vmatpush.msra.mxu0 0.0
    %675 = vmatpush.msra.mxu0 0.0
    %676 = vmatpush.msra.mxu0 0.0
    %677 = vmatpush.msra.mxu0 0.0
    %678 = vmatpush.msra.mxu0 %v651
    %679 = vmatpush.msra.mxu0 %v650
    %680 = vmatmul.f32.gmra.mxu0 %v653
    %v681 = vpop.f32.mrf.mxu0
    %v682 = vadd.f32 0.0, %v681
    %683 = vmatmul.f32.gmra.mxu0 %v656
    %v684 = vpop.f32.mrf.mxu0
    %v685 = vadd.f32 0.0, %v684
    %686 = vmatmul.f32.gmra.mxu0 %v659
    %v687 = vpop.f32.mrf.mxu0
    %v688 = vadd.f32 0.0, %v687
    %689 = vmatmul.f32.gmra.mxu0 %v662
    %v690 = vpop.f32.mrf.mxu0
    %v691 = vadd.f32 0.0, %v690
    %692 = vdwg.mxu0
    %v693 = vadd.f32 %v628, %v682
    %v694 = vadd.f32 %v629, %v685
    %v695 = vadd.f32 %v630, %v688
    %v696 = vadd.f32 %v631, %v691
    %s697 = scalar_lea.vmem [#allocation5], 112
    %v698 = vld [vmem:[%s697] sm:$0xff]
    %v699 = vld [vmem:[%s697 + $0x8] sm:$0xff]
    %v701 = vsel %vm138, %v633, 0
    %v704 = vsel %vm138, %v634, 0
    %v707 = vsel %vm138, %v635, 0
    %v710 = vsel %vm138, %v636, 0
    %712 = vmatpush.msra.mxu0 0.0
    %713 = vmatpush.msra.mxu0 0.0
    %714 = vmatpush.msra.mxu0 0.0
    %715 = vmatpush.msra.mxu0 0.0
    %716 = vmatpush.msra.mxu0 0.0
    %717 = vmatpush.msra.mxu0 0.0
    %718 = vmatpush.msra.mxu0 0.0
    %719 = vmatpush.msra.mxu0 0.0
    %720 = vmatpush.msra.mxu0 0.0
    %721 = vmatpush.msra.mxu0 0.0
    %722 = vmatpush.msra.mxu0 0.0
    %723 = vmatpush.msra.mxu0 0.0
    %724 = vmatpush.msra.mxu0 0.0
    %725 = vmatpush.msra.mxu0 0.0
    %726 = vmatpush.msra.mxu0 %v699
    %727 = vmatpush.msra.mxu0 %v698
    %728 = vmatmul.f32.gmra.mxu0 %v701
    %v729 = vpop.f32.mrf.mxu0
    %v730 = vadd.f32 0.0, %v729
    %731 = vmatmul.f32.gmra.mxu0 %v704
    %v732 = vpop.f32.mrf.mxu0
    %v733 = vadd.f32 0.0, %v732
    %734 = vmatmul.f32.gmra.mxu0 %v707
    %v735 = vpop.f32.mrf.mxu0
    %v736 = vadd.f32 0.0, %v735
    %737 = vmatmul.f32.gmra.mxu0 %v710
    %v738 = vpop.f32.mrf.mxu0
    %v739 = vadd.f32 0.0, %v738
    %740 = vdwg.mxu0
    %v741 = vadd.f32 %v693, %v730
    %v742 = vadd.f32 %v694, %v733
    %v743 = vadd.f32 %v695, %v736
    %v744 = vadd.f32 %v696, %v739
    %v745 = vrot.slane %v633, 1
    %v746 = vrot.slane %v634, 1
    %v747 = vrot.slane %v635, 1
    %v748 = vrot.slane %v636, 1
    %v749 = vsel %vm225, %v747, %v748
    %v750 = vsel %vm225, %v746, %v747
    %v751 = vsel %vm225, %v745, %v746
    %v752 = vsel %vm225, %v748, %v745
    %v753 = vsel %vm230, %v751, 0.0
    %v754 = vsel %vm231, %v750, 0.0
    %v755 = vsel %vm232, %v749, 0.0
    %v756 = vsel %vm233, %v752, 0.0
    %s757 = scalar_lea.vmem [#allocation5], 176
    %v758 = vld [vmem:[%s757] sm:$0xff]
    %v759 = vld [vmem:[%s757 + $0x8] sm:$0xff]
    %v761 = vsel %vm138, %v753, 0
    %v764 = vsel %vm138, %v754, 0
    %v767 = vsel %vm138, %v755, 0
    %v770 = vsel %vm138, %v756, 0
    %772 = vmatpush.msra.mxu0 0.0
    %773 = vmatpush.msra.mxu0 0.0
    %774 = vmatpush.msra.mxu0 0.0
    %775 = vmatpush.msra.mxu0 0.0
    %776 = vmatpush.msra.mxu0 0.0
    %777 = vmatpush.msra.mxu0 0.0
    %778 = vmatpush.msra.mxu0 0.0
    %779 = vmatpush.msra.mxu0 0.0
    %780 = vmatpush.msra.mxu0 0.0
    %781 = vmatpush.msra.mxu0 0.0
    %782 = vmatpush.msra.mxu0 0.0
    %783 = vmatpush.msra.mxu0 0.0
    %784 = vmatpush.msra.mxu0 0.0
    %785 = vmatpush.msra.mxu0 0.0
    %786 = vmatpush.msra.mxu0 %v759
    %787 = vmatpush.msra.mxu0 %v758
    %788 = vmatmul.f32.gmra.mxu0 %v761
    %v789 = vpop.f32.mrf.mxu0
    %v790 = vadd.f32 0.0, %v789
    %791 = vmatmul.f32.gmra.mxu0 %v764
    %v792 = vpop.f32.mrf.mxu0
    %v793 = vadd.f32 0.0, %v792
    %794 = vmatmul.f32.gmra.mxu0 %v767
    %v795 = vpop.f32.mrf.mxu0
    %v796 = vadd.f32 0.0, %v795
    %797 = vmatmul.f32.gmra.mxu0 %v770
    %v798 = vpop.f32.mrf.mxu0
    %v799 = vadd.f32 0.0, %v798
    %800 = vdwg.mxu0
    %v801 = vadd.f32 %v741, %v790
    %v802 = vadd.f32 %v742, %v793
    %v803 = vadd.f32 %v743, %v796
    %v804 = vadd.f32 %v744, %v799
    %805 = vrot.lane.b32.xlu0 %v801, 120
    %v806 = vpop.permute.xlu0 %805
    %807 = vrot.lane.b32.xlu0 %v802, 120
    %v808 = vpop.permute.xlu0 %807
    %809 = vrot.lane.b32.xlu0 %v803, 120
    %v810 = vpop.permute.xlu0 %809
    %811 = vrot.lane.b32.xlu0 %v804, 120
    %v812 = vpop.permute.xlu0 %811
    %v813 = vmax.f32 %v801, %v806
    %v814 = vmax.f32 %v802, %v808
    %v815 = vmax.f32 %v803, %v810
    %v816 = vmax.f32 %v804, %v812
    %v817 = vrot.slane %v813, 1
    %v818 = vrot.slane %v814, 1
    %v819 = vrot.slane %v815, 1
    %v820 = vrot.slane %v816, 1
    %v821 = vsel %vm225, %v819, %v820
    %v822 = vsel %vm225, %v818, %v819
    %v823 = vsel %vm225, %v817, %v818
    %v824 = vsel %vm225, %v820, %v817
    %v825 = vmax.f32 %v813, %v823
    %v826 = vmax.f32 %v814, %v822
    %v827 = vmax.f32 %v815, %v821
    %v828 = vmax.f32 %v816, %v824
    %v829 = vld [vmem:[%s2] sm:$0x1]
    %v831 = vperm.slane %v829, 0
    %v833 = vadd.f32 %v825, %v831
    %v834 = vadd.f32 %v826, %v831
    %v835 = vadd.f32 %v827, %v831
    %v836 = vadd.f32 %v828, %v831
    %v837 = vmax.f32 %v833, 0.0
    %v838 = vmax.f32 %v834, 0.0
    %v839 = vmax.f32 %v835, 0.0
    %v840 = vmax.f32 %v836, 0.0
    %v841 = vld [vmem:[%s3] sm:$0xff]
    %v842 = vld [vmem:[%s3 + $0x8] sm:$0xff]
    %v843 = vld [vmem:[%s3 + $0x10] sm:$0xff]
    %v844 = vld [vmem:[%s3 + $0x18] sm:$0xff]
    %v845 = vld [vmem:[%s3 + $0x20] sm:$0xff]
    %v846 = vld [vmem:[%s3 + $0x28] sm:$0xff]
    %v847 = vld [vmem:[%s3 + $0x30] sm:$0xff]
    %v848 = vld [vmem:[%s3 + $0x38] sm:$0xff]
    %v849 = vld [vmem:[%s3 + $0x40] sm:$0xff]
    %v850 = vld [vmem:[%s3 + $0x48] sm:$0xff]
    %v851 = vld [vmem:[%s3 + $0x50] sm:$0xff]
    %v852 = vld [vmem:[%s3 + $0x58] sm:$0xff]
    %v853 = vld [vmem:[%s3 + $0x60] sm:$0xff]
    %v854 = vld [vmem:[%s3 + $0x68] sm:$0xff]
    %v855 = vld [vmem:[%s3 + $0x70] sm:$0xff]
    %v856 = vld [vmem:[%s3 + $0x78] sm:$0xff]
    %v857 = vrot.slane %v837, 2
    %v858 = vrot.slane %v838, 2
    %v859 = vrot.slane %v839, 2
    %v860 = vrot.slane %v840, 2
    %vm861 = vcmp.lt.s32.totalorder %v60, 6
    %v862 = vsel %vm861, %v859, %v860
    %v863 = vsel %vm861, %v858, %v859
    %v864 = vsel %vm861, %v857, %v858
    %v865 = vsel %vm861, %v860, %v857
    %s866 = scalar_lea.vmem %s3, 128
    %v867 = vld [vmem:[%s866] sm:$0xff]
    %v868 = vld [vmem:[%s866 + $0x8] sm:$0xff]
    %v869 = vld [vmem:[%s866 + $0x10] sm:$0xff]
    %v870 = vld [vmem:[%s866 + $0x18] sm:$0xff]
    %v871 = vld [vmem:[%s866 + $0x20] sm:$0xff]
    %v872 = vld [vmem:[%s866 + $0x28] sm:$0xff]
    %v873 = vld [vmem:[%s866 + $0x30] sm:$0xff]
    %v874 = vld [vmem:[%s866 + $0x38] sm:$0xff]
    %v875 = vld [vmem:[%s866 + $0x40] sm:$0xff]
    %v876 = vld [vmem:[%s866 + $0x48] sm:$0xff]
    %v877 = vld [vmem:[%s866 + $0x50] sm:$0xff]
    %v878 = vld [vmem:[%s866 + $0x58] sm:$0xff]
    %v879 = vld [vmem:[%s866 + $0x60] sm:$0xff]
    %v880 = vld [vmem:[%s866 + $0x68] sm:$0xff]
    %v881 = vld [vmem:[%s866 + $0x70] sm:$0xff]
    %v882 = vld [vmem:[%s866 + $0x78] sm:$0xff]
    %883 = vmatpush.msra.mxu0 %v882
    %884 = vmatpush.msra.mxu0 %v881
    %885 = vmatpush.msra.mxu0 %v880
    %886 = vmatpush.msra.mxu0 %v879
    %887 = vmatpush.msra.mxu0 %v878
    %888 = vmatpush.msra.mxu0 %v877
    %889 = vmatpush.msra.mxu0 %v876
    %890 = vmatpush.msra.mxu0 %v875
    %891 = vmatpush.msra.mxu0 %v874
    %892 = vmatpush.msra.mxu0 %v873
    %893 = vmatpush.msra.mxu0 %v872
    %894 = vmatpush.msra.mxu0 %v871
    %895 = vmatpush.msra.mxu0 %v870
    %896 = vmatpush.msra.mxu0 %v869
    %897 = vmatpush.msra.mxu0 %v868
    %898 = vmatpush.msra.mxu0 %v867
    %899 = vmatmul.f32.gmra.mxu0 %v864
    %v900 = vpop.f32.mrf.mxu0
    %v901 = vadd.f32 0.0, %v900
    %902 = vmatmul.f32.gmra.mxu0 %v863
    %v903 = vpop.f32.mrf.mxu0
    %v904 = vadd.f32 0.0, %v903
    %905 = vmatmul.f32.gmra.mxu0 %v862
    %v906 = vpop.f32.mrf.mxu0
    %v907 = vadd.f32 0.0, %v906
    %908 = vmatmul.f32.gmra.mxu0 %v865
    %v909 = vpop.f32.mrf.mxu0
    %v910 = vadd.f32 0.0, %v909
    %911 = vdwg.mxu0
    %912 = vmatpush.msra.mxu0 %v856
    %913 = vmatpush.msra.mxu0 %v855
    %914 = vmatpush.msra.mxu0 %v854
    %915 = vmatpush.msra.mxu0 %v853
    %916 = vmatpush.msra.mxu0 %v852
    %917 = vmatpush.msra.mxu0 %v851
    %918 = vmatpush.msra.mxu0 %v850
    %919 = vmatpush.msra.mxu0 %v849
    %920 = vmatpush.msra.mxu0 %v848
    %921 = vmatpush.msra.mxu0 %v847
    %922 = vmatpush.msra.mxu0 %v846
    %923 = vmatpush.msra.mxu0 %v845
    %924 = vmatpush.msra.mxu0 %v844
    %925 = vmatpush.msra.mxu0 %v843
    %926 = vmatpush.msra.mxu0 %v842
    %927 = vmatpush.msra.mxu0 %v841
    %928 = vmatmul.f32.gmra.mxu0 %v837
    %v929 = vpop.f32.mrf.mxu0
    %v930 = vadd.f32 %v901, %v929
    %931 = vmatmul.f32.gmra.mxu0 %v838
    %v932 = vpop.f32.mrf.mxu0
    %v933 = vadd.f32 %v904, %v932
    %934 = vmatmul.f32.gmra.mxu0 %v839
    %v935 = vpop.f32.mrf.mxu0
    %v936 = vadd.f32 %v907, %v935
    %937 = vmatmul.f32.gmra.mxu0 %v840
    %v938 = vpop.f32.mrf.mxu0
    %v939 = vadd.f32 %v910, %v938
    %940 = vdwg.mxu0
    %v941 = vrot.slane %v837, 4
    %v942 = vrot.slane %v838, 4
    %v943 = vrot.slane %v839, 4
    %v944 = vrot.slane %v840, 4
    %vm945 = vcmp.lt.s32.totalorder %v60, 4
    %v946 = vsel %vm945, %v943, %v944
    %v947 = vsel %vm945, %v942, %v943
    %v948 = vsel %vm945, %v941, %v942
    %v949 = vsel %vm945, %v944, %v941
    %s950 = scalar_lea.vmem %s3, 256
    %v951 = vld [vmem:[%s950] sm:$0xff]
    %v952 = vld [vmem:[%s950 + $0x8] sm:$0xff]
    %v953 = vld [vmem:[%s950 + $0x10] sm:$0xff]
    %v954 = vld [vmem:[%s950 + $0x18] sm:$0xff]
    %v955 = vld [vmem:[%s950 + $0x20] sm:$0xff]
    %v956 = vld [vmem:[%s950 + $0x28] sm:$0xff]
    %v957 = vld [vmem:[%s950 + $0x30] sm:$0xff]
    %v958 = vld [vmem:[%s950 + $0x38] sm:$0xff]
    %v959 = vld [vmem:[%s950 + $0x40] sm:$0xff]
    %v960 = vld [vmem:[%s950 + $0x48] sm:$0xff]
    %v961 = vld [vmem:[%s950 + $0x50] sm:$0xff]
    %v962 = vld [vmem:[%s950 + $0x58] sm:$0xff]
    %v963 = vld [vmem:[%s950 + $0x60] sm:$0xff]
    %v964 = vld [vmem:[%s950 + $0x68] sm:$0xff]
    %v965 = vld [vmem:[%s950 + $0x70] sm:$0xff]
    %v966 = vld [vmem:[%s950 + $0x78] sm:$0xff]
    %967 = vmatpush.msra.mxu0 %v966
    %968 = vmatpush.msra.mxu0 %v965
    %969 = vmatpush.msra.mxu0 %v964
    %970 = vmatpush.msra.mxu0 %v963
    %971 = vmatpush.msra.mxu0 %v962
    %972 = vmatpush.msra.mxu0 %v961
    %973 = vmatpush.msra.mxu0 %v960
    %974 = vmatpush.msra.mxu0 %v959
    %975 = vmatpush.msra.mxu0 %v958
    %976 = vmatpush.msra.mxu0 %v957
    %977 = vmatpush.msra.mxu0 %v956
    %978 = vmatpush.msra.mxu0 %v955
    %979 = vmatpush.msra.mxu0 %v954
    %980 = vmatpush.msra.mxu0 %v953
    %981 = vmatpush.msra.mxu0 %v952
    %982 = vmatpush.msra.mxu0 %v951
    %983 = vmatmul.f32.gmra.mxu0 %v948
    %v984 = vpop.f32.mrf.mxu0
    %v985 = vadd.f32 0.0, %v984
    %986 = vmatmul.f32.gmra.mxu0 %v947
    %v987 = vpop.f32.mrf.mxu0
    %v988 = vadd.f32 0.0, %v987
    %989 = vmatmul.f32.gmra.mxu0 %v946
    %v990 = vpop.f32.mrf.mxu0
    %v991 = vadd.f32 0.0, %v990
    %992 = vmatmul.f32.gmra.mxu0 %v949
    %v993 = vpop.f32.mrf.mxu0
    %v994 = vadd.f32 0.0, %v993
    %995 = vdwg.mxu0
    %v996 = vadd.f32 %v930, %v985
    %v997 = vadd.f32 %v933, %v988
    %v998 = vadd.f32 %v936, %v991
    %v999 = vadd.f32 %v939, %v994
    %1000 = vrot.lane.b32.xlu0 %v996, 120
    %v1001 = vpop.permute.xlu0 %1000
    %1002 = vrot.lane.b32.xlu0 %v997, 120
    %v1003 = vpop.permute.xlu0 %1002
    %1004 = vrot.lane.b32.xlu0 %v998, 120
    %v1005 = vpop.permute.xlu0 %1004
    %1006 = vrot.lane.b32.xlu0 %v999, 120
    %v1007 = vpop.permute.xlu0 %1006
    %v1008 = vmax.f32 %v996, %v1001
    %v1009 = vmax.f32 %v997, %v1003
    %v1010 = vmax.f32 %v998, %v1005
    %v1011 = vmax.f32 %v999, %v1007
    %v1012 = vrot.slane %v1008, 2
    %v1013 = vrot.slane %v1009, 2
    %v1014 = vrot.slane %v1010, 2
    %v1015 = vrot.slane %v1011, 2
    %v1016 = vsel %vm861, %v1014, %v1015
    %v1017 = vsel %vm861, %v1013, %v1014
    %v1018 = vsel %vm861, %v1012, %v1013
    %v1019 = vsel %vm861, %v1015, %v1012
    %v1020 = vmax.f32 %v1008, %v1018
    %v1021 = vmax.f32 %v1009, %v1017
    %v1022 = vmax.f32 %v1010, %v1016
    %v1023 = vmax.f32 %v1011, %v1019
    %v1024 = vld [vmem:[%s4] sm:$0x1]
    %v1026 = vperm.slane %v1024, 0
    %v1028 = vadd.f32 %v1020, %v1026
    %v1029 = vadd.f32 %v1021, %v1026
    %v1030 = vadd.f32 %v1022, %v1026
    %v1031 = vadd.f32 %v1023, %v1026
    %v1032 = vmax.f32 %v1028, 0.0
    %v1033 = vmax.f32 %v1029, 0.0
    %v1034 = vmax.f32 %v1030, 0.0
    %v1035 = vmax.f32 %v1031, 0.0
    %v1036 = vld [vmem:[%s5] sm:$0xff]
    %v1037 = vld [vmem:[%s5 + $0x8] sm:$0xff]
    %v1038 = vld [vmem:[%s5 + $0x10] sm:$0xff]
    %v1039 = vld [vmem:[%s5 + $0x18] sm:$0xff]
    %v1040 = vld [vmem:[%s5 + $0x20] sm:$0xff]
    %v1041 = vld [vmem:[%s5 + $0x28] sm:$0xff]
    %v1042 = vld [vmem:[%s5 + $0x30] sm:$0xff]
    %v1043 = vld [vmem:[%s5 + $0x38] sm:$0xff]
    %v1044 = vld [vmem:[%s5 + $0x40] sm:$0xff]
    %v1045 = vld [vmem:[%s5 + $0x48] sm:$0xff]
    %v1046 = vld [vmem:[%s5 + $0x50] sm:$0xff]
    %v1047 = vld [vmem:[%s5 + $0x58] sm:$0xff]
    %v1048 = vld [vmem:[%s5 + $0x60] sm:$0xff]
    %v1049 = vld [vmem:[%s5 + $0x68] sm:$0xff]
    %v1050 = vld [vmem:[%s5 + $0x70] sm:$0xff]
    %v1051 = vld [vmem:[%s5 + $0x78] sm:$0xff]
    %s1052 = scalar_lea.vmem %s5, 128
    %v1053 = vld [vmem:[%s1052] sm:$0xff]
    %v1054 = vld [vmem:[%s1052 + $0x8] sm:$0xff]
    %v1055 = vld [vmem:[%s1052 + $0x10] sm:$0xff]
    %v1056 = vld [vmem:[%s1052 + $0x18] sm:$0xff]
    %v1057 = vld [vmem:[%s1052 + $0x20] sm:$0xff]
    %v1058 = vld [vmem:[%s1052 + $0x28] sm:$0xff]
    %v1059 = vld [vmem:[%s1052 + $0x30] sm:$0xff]
    %v1060 = vld [vmem:[%s1052 + $0x38] sm:$0xff]
    %v1061 = vld [vmem:[%s1052 + $0x40] sm:$0xff]
    %v1062 = vld [vmem:[%s1052 + $0x48] sm:$0xff]
    %v1063 = vld [vmem:[%s1052 + $0x50] sm:$0xff]
    %v1064 = vld [vmem:[%s1052 + $0x58] sm:$0xff]
    %v1065 = vld [vmem:[%s1052 + $0x60] sm:$0xff]
    %v1066 = vld [vmem:[%s1052 + $0x68] sm:$0xff]
    %v1067 = vld [vmem:[%s1052 + $0x70] sm:$0xff]
    %v1068 = vld [vmem:[%s1052 + $0x78] sm:$0xff]
    %v1071 = vrot.slane %v1032, 4
    %v1072 = vrot.slane %v1034, 3
    %vm1073 = vcmask 1041409
    %v1074 = vsel %vm1073, %v1072, %v1071
    %1076 = vmatpush.msra.mxu0 %v1068
    %1077 = vmatpush.msra.mxu0 %v1067
    %1078 = vmatpush.msra.mxu0 %v1066
    %1079 = vmatpush.msra.mxu0 %v1065
    %1080 = vmatpush.msra.mxu0 %v1064
    %1081 = vmatpush.msra.mxu0 %v1063
    %1082 = vmatpush.msra.mxu0 %v1062
    %1083 = vmatpush.msra.mxu0 %v1061
    %1084 = vmatpush.msra.mxu0 %v1060
    %1085 = vmatpush.msra.mxu0 %v1059
    %1086 = vmatpush.msra.mxu0 %v1058
    %1087 = vmatpush.msra.mxu0 %v1057
    %1088 = vmatpush.msra.mxu0 %v1056
    %1089 = vmatpush.msra.mxu0 %v1055
    %1090 = vmatpush.msra.mxu0 %v1054
    %1091 = vmatpush.msra.mxu0 %v1053
    %1092 = vmatmul.f32.gmra.mxu0 %v1074
    %v1093 = vpop.f32.mrf.mxu0
    %v1094 = vadd.f32 0.0, %v1093
    %1095 = vdwg.mxu0
    %v1096 = vrot.slane %v1034, 7
    %v1097 = vsel %vm1073, %v1096, %v1032
    %1099 = vmatpush.msra.mxu0 %v1051
    %1100 = vmatpush.msra.mxu0 %v1050
    %1101 = vmatpush.msra.mxu0 %v1049
    %1102 = vmatpush.msra.mxu0 %v1048
    %1103 = vmatpush.msra.mxu0 %v1047
    %1104 = vmatpush.msra.mxu0 %v1046
    %1105 = vmatpush.msra.mxu0 %v1045
    %1106 = vmatpush.msra.mxu0 %v1044
    %1107 = vmatpush.msra.mxu0 %v1043
    %1108 = vmatpush.msra.mxu0 %v1042
    %1109 = vmatpush.msra.mxu0 %v1041
    %1110 = vmatpush.msra.mxu0 %v1040
    %1111 = vmatpush.msra.mxu0 %v1039
    %1112 = vmatpush.msra.mxu0 %v1038
    %1113 = vmatpush.msra.mxu0 %v1037
    %1114 = vmatpush.msra.mxu0 %v1036
    %1115 = vmatmul.f32.gmra.mxu0 %v1097
    %v1116 = vpop.f32.mrf.mxu0
    %v1117 = vadd.f32 %v1094, %v1116
    %1118 = vdwg.mxu0
    %s1119 = scalar_lea.vmem %s5, 256
    %v1120 = vld [vmem:[%s1119] sm:$0xff]
    %v1121 = vld [vmem:[%s1119 + $0x8] sm:$0xff]
    %v1122 = vld [vmem:[%s1119 + $0x10] sm:$0xff]
    %v1123 = vld [vmem:[%s1119 + $0x18] sm:$0xff]
    %v1124 = vld [vmem:[%s1119 + $0x20] sm:$0xff]
    %v1125 = vld [vmem:[%s1119 + $0x28] sm:$0xff]
    %v1126 = vld [vmem:[%s1119 + $0x30] sm:$0xff]
    %v1127 = vld [vmem:[%s1119 + $0x38] sm:$0xff]
    %v1128 = vld [vmem:[%s1119 + $0x40] sm:$0xff]
    %v1129 = vld [vmem:[%s1119 + $0x48] sm:$0xff]
    %v1130 = vld [vmem:[%s1119 + $0x50] sm:$0xff]
    %v1131 = vld [vmem:[%s1119 + $0x58] sm:$0xff]
    %v1132 = vld [vmem:[%s1119 + $0x60] sm:$0xff]
    %v1133 = vld [vmem:[%s1119 + $0x68] sm:$0xff]
    %v1134 = vld [vmem:[%s1119 + $0x70] sm:$0xff]
    %v1135 = vld [vmem:[%s1119 + $0x78] sm:$0xff]
    %v1138 = vrot.slane %v1035, 7
    %v1139 = vsel %vm1073, %v1138, %v1033
    %1141 = vmatpush.msra.mxu0 %v1135
    %1142 = vmatpush.msra.mxu0 %v1134
    %1143 = vmatpush.msra.mxu0 %v1133
    %1144 = vmatpush.msra.mxu0 %v1132
    %1145 = vmatpush.msra.mxu0 %v1131
    %1146 = vmatpush.msra.mxu0 %v1130
    %1147 = vmatpush.msra.mxu0 %v1129
    %1148 = vmatpush.msra.mxu0 %v1128
    %1149 = vmatpush.msra.mxu0 %v1127
    %1150 = vmatpush.msra.mxu0 %v1126
    %1151 = vmatpush.msra.mxu0 %v1125
    %1152 = vmatpush.msra.mxu0 %v1124
    %1153 = vmatpush.msra.mxu0 %v1123
    %1154 = vmatpush.msra.mxu0 %v1122
    %1155 = vmatpush.msra.mxu0 %v1121
    %1156 = vmatpush.msra.mxu0 %v1120
    %1157 = vmatmul.f32.gmra.mxu0 %v1139
    %v1158 = vpop.f32.mrf.mxu0
    %v1159 = vadd.f32 0.0, %v1158
    %1160 = vdwg.mxu0
    %v1161 = vadd.f32 %v1117, %v1159
    %v1162 = vld [vmem:[%s6] sm:$0x1]
    %v1164 = vperm.slane %v1162, 0
    %v1166 = vadd.f32 %v1161, %v1164
    %vm1167 = vcmask 254976
    %1168 = vst.msk [vmem:[#allocation7] sm:$0x3] %vm1167, %v1166
    // Predicated region
    $region38: #{tpu_custom_call.1} parent=1 // pred_check
      _
    $region39: #{tpu_custom_call.1} parent=1 // pred_check_branch
      %1170 = sbr.rel (0) target = $region41
    $region40: #{tpu_custom_call.1} parent=1 // pred_region
      %1172 = vsyncadd [#allocation4], 0
      %s1174 = sshll.u32 [#allocation7], 4
      %s1175 = int_to_ptr.vmem [resolvable:$true] %s1174
      %s1176 = sshll.u32 %s7, 4
      %s1177 = int_to_ptr.hbm [resolvable:$true] %s1176
      %1179 = dma.vmem_to_hbm [thread:$0]  %s1175, 32, %s1177, [#allocation4]
    $region41: #{tpu_custom_call.1} parent=1 // pred_fallthru
      _
    // Predicated region
    $region42: #{tpu_custom_call.1} parent=1 // pred_check
      _
    $region43: #{tpu_custom_call.1} parent=1 // pred_check_branch
      %1181 = sbr.rel (0) target = $region45
    $region44: #{tpu_custom_call.1} parent=1 // pred_region
      %1183 = dma.done [#allocation4], 32
    $region45: #{tpu_custom_call.1} parent=1 // pred_fallthru
      _
    %1184 = vsyncpa [#allocation3], 1
    %1185 = vsyncpa [#allocation6], 1
    %1186 = vsyncpa [#allocation4], 1

</llo_original>
